<compile_context>
chip_gen: v7x
topology: tpu7x:2x2x1
jax: 0.10.0
libtpu: 0.0.40
codegen_flags: <defaults>
</compile_context>

<pallas_src>
import functools

import jax
import jax.numpy as jnp
import numpy as np
from jax.experimental import pallas as pl
from jax.experimental.pallas import tpu as pltpu


def _round_up(v, m):
    return (v + m - 1) // m * m


def _mask_pool_kernel(x_ref, w_ref, b_ref, feat_ref, gram_ref, *,
                      inv_hw, s_total, need_mask):
    # x_ref    : (Bt, C, ts)  spatial tile of Bt batch elements (native dtype)
    # w_ref    : (P, C)       1x1-conv weight (native dtype)
    # b_ref    : (P, 1)       1x1-conv bias (f32)
    # feat_ref : (Bt, P, C)   mask-weighted GAP features (resident f32 acc)
    # gram_ref : (Bt, P, P)   mask gram matrix           (resident f32 acc)
    s = pl.program_id(1)
    bt, _, ts = x_ref.shape

    @pl.when(s == 0)
    def _():
        feat_ref[...] = jnp.zeros_like(feat_ref)
        gram_ref[...] = jnp.zeros_like(gram_ref)

    if need_mask:
        # Lanes past the true spatial extent (boundary block padding) are
        # undefined -> force them to zero in both operands.
        lane = jax.lax.broadcasted_iota(jnp.int32, (1, ts), 1)
        ok = lane < (s_total - s * ts)

    w = w_ref[...]
    b = b_ref[...]
    for j in range(bt):                                  # static unroll over Bt
        xj = x_ref[j]                                    # (C, ts)
        if need_mask:
            xj = jnp.where(ok, xj, jnp.zeros_like(xj))
        logits = jnp.dot(w, xj, preferred_element_type=jnp.float32) + b   # (P, ts)
        masks = jax.nn.sigmoid(logits)                   # f32 (EUP)
        if need_mask:
            masks = jnp.where(ok, masks, 0.0)
        mx = masks.astype(xj.dtype)                      # match x dtype for MXU
        # feat += masks @ x^T   (contract the spatial tile axis)
        feat_ref[j] += jax.lax.dot_general(
            mx, xj, (((1,), (1,)), ((), ())),
            preferred_element_type=jnp.float32)          # (P, C)
        # gram += masks @ masks^T
        gram_ref[j] += jax.lax.dot_general(
            mx, mx, (((1,), (1,)), ((), ())),
            preferred_element_type=jnp.float32)          # (P, P)

    @pl.when(s == pl.num_programs(1) - 1)
    def _():
        feat_ref[...] = feat_ref[...] * inv_hw           # avg_pool2d scaling


def _pick_tiles(B, C, S, x_bytes, *, x_vmem_budget=12 << 20):
    """Choose (batch_tile, spatial_tile) within a per-generation-safe VMEM budget."""
    cap = max(128, (x_vmem_budget // (2 * C * x_bytes)) // 128 * 128)
    if S <= 128:
        ts = S                                    # full extent, no masking
    elif S % 128 == 0:
        ts = min(S, cap)
    else:
        ts = min((S // 128) * 128, cap)           # remainder tile -> lane mask
    n_st = pl.cdiv(S, ts)
    bt = 1
    if n_st <= 2:                                 # few spatial steps: batch them
        for cand in range(B, 0, -1):
            if B % cand:
                continue
            if B // cand < 2 and B > 1:
                continue                          # keep >=2 steps for v7x megacore
            if 2 * cand * C * ts * x_bytes <= x_vmem_budget:
                bt = cand
                break
    return bt, ts, n_st


def cossim_forward(x_nchw, w, bias, *, spatial_tile=None, batch_tile=None,
                   vmem_limit_bytes=None):
    """x_nchw: (B, C, H, W) native dtype; w: (P, C); bias: (P,).

    Returns (loss, loss_ort) matching CosSim.forward.
    """
    B, C, H, W = x_nchw.shape
    P = w.shape[0]
    assert B % 3 == 0, "batch must be divisible by 3 (v / m / t chunks)"
    S = H * W
    x = x_nchw.reshape(B, C, S)                   # free row-major view, no cast
    x_bytes = x.dtype.itemsize

    auto_bt, auto_ts, _ = _pick_tiles(B, C, S, x_bytes)
    ts = spatial_tile if spatial_tile is not None else auto_ts
    bt = batch_tile if batch_tile is not None else auto_bt
    assert B % bt == 0
    n_st = pl.cdiv(S, ts)
    need_mask = (S % ts) != 0

    w_k = w.astype(x.dtype)
    b_k = bias.reshape(P, 1).astype(jnp.float32)

    if vmem_limit_bytes is None:
        xb = bt * C * _round_up(ts, 128) * x_bytes
        wb = _round_up(P, 8) * _round_up(C, 128) * w_k.dtype.itemsize
        bb = _round_up(P, 8) * 128 * 4
        fb = bt * _round_up(P, 8) * _round_up(C, 128) * 4
        gb = bt * _round_up(P, 8) * 128 * 4
        need = 2 * (xb + wb + bb + fb + gb)       # double-buffered
        vmem_limit_bytes = min(max(int(1.5 * need) + (2 << 20), 20 << 20), 48 << 20)

    cost = pl.CostEstimate(
        flops=int(4 * B * P * C * S + 2 * B * P * P * S),
        transcendentals=int(B * P * S),
        bytes_accessed=int(B * C * S * x_bytes + P * C * w_k.dtype.itemsize
                           + B * P * C * 4 + B * P * P * 4),
    )

    feat, gram = pl.pallas_call(
        functools.partial(_mask_pool_kernel, inv_hw=1.0 / S,
                          s_total=S, need_mask=need_mask),
        out_shape=(jax.ShapeDtypeStruct((B, P, C), jnp.float32),
                   jax.ShapeDtypeStruct((B, P, P), jnp.float32)),
        grid=(B // bt, n_st),
        in_specs=[
            pl.BlockSpec((bt, C, ts), lambda b, s: (b, 0, s)),
            pl.BlockSpec((P, C), lambda b, s: (0, 0)),     # fetched once
            pl.BlockSpec((P, 1), lambda b, s: (0, 0)),
        ],
        out_specs=[
            pl.BlockSpec((bt, P, C), lambda b, s: (b, 0, 0)),   # resident over s
            pl.BlockSpec((bt, P, P), lambda b, s: (b, 0, 0)),   # resident over s
        ],
        compiler_params=pltpu.CompilerParams(
            dimension_semantics=("parallel", "arbitrary"),
            vmem_limit_bytes=int(vmem_limit_bytes)),
        cost_estimate=cost,
    )(x, w_k, b_k)

    # Tiny scalar tail in plain jnp (a few hundred KB; XLA fuses it — avoids a
    # second pallas_call whose cost would be pure launch latency).
    B3 = B // 3
    v, m, t = feat[:B3], feat[B3:2 * B3], feat[2 * B3:]        # (B3, P, C)
    nv = jnp.sqrt(jnp.sum(v * v, axis=-1))
    nm = jnp.sqrt(jnp.sum(m * m, axis=-1))
    nt = jnp.sqrt(jnp.sum(t * t, axis=-1))
    cvm = jnp.sum(v * m, axis=-1) / jnp.maximum(nv * nm, 1e-12)
    ctm = jnp.sum(t * m, axis=-1) / jnp.maximum(nt * nm, 1e-12)
    loss = jnp.mean(jnp.sum(2.0 / (cvm + ctm) - 1.0, axis=-1))

    tri = jnp.triu(jnp.ones((P, P), jnp.float32), k=1)
    loss_ort = jnp.sum(gram * tri[None]) * (2.0 / (B * P * (P - 1)))
    return loss, loss_ort


def reference_forward(x, w, bias):
    """Pure-JAX reference mirroring the PyTorch forward step by step."""
    B, C, H, W = x.shape
    P = w.shape[0]
    xf = x.astype(jnp.float32)
    logits = jnp.einsum('pc,bchw->bphw', w.astype(jnp.float32), xf) \
        + bias[None, :, None, None].astype(jnp.float32)
    masks = jax.nn.sigmoid(logits)                                  # (B, P, H, W)
    B3 = B // 3
    dist = jnp.zeros((B3,), jnp.float32)
    for i in range(P):
        mask = masks[:, i:i + 1]                                    # (B, 1, H, W)
        feat = jnp.mean(mask * xf, axis=(2, 3))                     # (B, C)
        v, m, t = feat[:B3], feat[B3:2 * B3], feat[2 * B3:]

        def _normalize(a):
            return a / jnp.maximum(jnp.linalg.norm(a, axis=1, keepdims=True), 1e-12)

        v, m, t = _normalize(v), _normalize(m), _normalize(t)

        def _cos(a, b):
            return jnp.sum(a * b, axis=1) / jnp.maximum(
                jnp.linalg.norm(a, axis=1) * jnp.linalg.norm(b, axis=1), 1e-8)

        dist = dist + 2.0 / (_cos(v, m) + _cos(t, m)) - 1.0
    loss = jnp.mean(dist)

    mflat = masks.reshape(B, P, H * W)
    g = jnp.einsum('bps,bqs->bpq', mflat, mflat)
    tri = jnp.triu(jnp.ones((P, P), jnp.float32), k=1)
    loss_ort = jnp.sum(g * tri[None]) / (B * P * (P - 1) / 2)
    return loss, loss_ort


if __name__ == "__main__":
    # Small shapes consistent with the module: part_num=6, batch divisible by 3
    # (v/m/t chunks).  Production dim=2048 works with the same kernels.
    B3, C, H, W, P = 2, 256, 16, 16, 6
    B = 3 * B3

    key = jax.random.PRNGKey(0)
    kb, kn, kw = jax.random.split(key, 3)
    base = jax.random.normal(kb, (1, B3, C, H, W), jnp.float32)
    noise = jax.random.normal(kn, (3, B3, C, H, W), jnp.float32)
    # Correlated v/m/t thirds keep 2/(cos+cos) well-conditioned (ReID-like).
    x = (base + 0.25 * noise).reshape(B, C, H, W)
    w = 0.05 * jax.random.normal(kw, (P, C), jnp.float32)
    bias = jnp.zeros((P,), jnp.float32)   # torch.nn.init.constant_(bias, 0.0)

    fwd = jax.jit(cossim_forward)

    # f32 path (S divisible by 128).
    loss, loss_ort = jax.block_until_ready(fwd(x, w, bias))
    ref_loss, ref_ort = reference_forward(x, w, bias)
    np.testing.assert_allclose(float(loss), float(ref_loss), rtol=5e-3, atol=5e-3)
    np.testing.assert_allclose(float(loss_ort), float(ref_ort), rtol=5e-3, atol=5e-3)

    # Native-bf16 path: no wrapper upcast, f32 accumulation inside the kernel.
    loss_bf, ort_bf = jax.block_until_ready(
        fwd(x.astype(jnp.bfloat16), w.astype(jnp.bfloat16), bias))
    np.testing.assert_allclose(float(loss_bf), float(ref_loss), rtol=1e-1, atol=5e-2)
    np.testing.assert_allclose(float(ort_bf), float(ref_ort), rtol=1e-1, atol=5e-2)

    # Remainder-tile path: S = 12*12 = 144 is not a multiple of 128.
    x2 = x[:, :, :12, :12]
    loss2, ort2 = jax.block_until_ready(fwd(x2, w, bias))
    ref_loss2, ref_ort2 = reference_forward(x2, w, bias)
    np.testing.assert_allclose(float(loss2), float(ref_loss2), rtol=5e-3, atol=5e-3)
    np.testing.assert_allclose(float(ort2), float(ref_ort2), rtol=5e-3, atol=5e-3)

    print("KERNEL_OK")
</pallas_src>

<mosaic_0001>
module attributes {stable_mosaic.version = 11 : i64} {
  func.func @_mask_pool_kernel(%arg0: i32, %arg1: i32, %arg2: memref<3x256x256xf32, #tpu.memory_space<vmem>>, %arg3: memref<6x256xf32, #tpu.memory_space<vmem>>, %arg4: memref<6x1xf32, #tpu.memory_space<vmem>>, %arg5: memref<3x6x256xf32, #tpu.memory_space<vmem>>, %arg6: memref<3x6x6xf32, #tpu.memory_space<vmem>>) attributes {dimension_semantics = [#tpu.dimension_semantics<parallel>, #tpu.dimension_semantics<arbitrary>], iteration_bounds = array<i64: 2, 1>, scalar_prefetch = 0 : i64, scratch_operands = 0 : i64, tpu.core_type = #tpu.core_type<tc>, window_params = [{transform_indices = @transform_0, window_bounds = array<i64: 3, 256, 256>}, {pipeline_mode = #tpu.pipeline_mode<synchronous>, transform_indices = @transform_1, window_bounds = array<i64: 6, 256>}, {pipeline_mode = #tpu.pipeline_mode<synchronous>, transform_indices = @transform_2, window_bounds = array<i64: 6, 1>}, {transform_indices = @transform_3, window_bounds = array<i64: 3, 6, 256>}, {transform_indices = @transform_4, window_bounds = array<i64: 3, 6, 6>}]} {
    %c0_i32 = arith.constant 0 : i32
    %0 = arith.cmpi eq, %arg1, %c0_i32 : i32
    %1 = arith.extui %0 : i1 to i32
    %c0_i32_0 = arith.constant 0 : i32
    %2 = arith.cmpi ne, %1, %c0_i32_0 : i32
    scf.if %2 {
      %cst_60 = arith.constant 0.000000e+00 : f32
      %80 = vector.broadcast %cst_60 : f32 to vector<3x6x256xf32>
      %c0_61 = arith.constant 0 : index
      %c0_62 = arith.constant 0 : index
      %c0_63 = arith.constant 0 : index
      %81 = vector.load %arg5[%c0_61, %c0_62, %c0_63] : memref<3x6x256xf32, #tpu.memory_space<vmem>>, vector<3x6x256xf32>
      tpu.vector_store %arg5[%c0_61, %c0_62, %c0_63], %80 {strides = array<i32>} : memref<3x6x256xf32, #tpu.memory_space<vmem>>, vector<3x6x256xf32>,
      %cst_64 = arith.constant 0.000000e+00 : f32
      %82 = vector.broadcast %cst_64 : f32 to vector<3x6x6xf32>
      %c0_65 = arith.constant 0 : index
      %c0_66 = arith.constant 0 : index
      %c0_67 = arith.constant 0 : index
      %83 = vector.load %arg6[%c0_65, %c0_66, %c0_67] : memref<3x6x6xf32, #tpu.memory_space<vmem>>, vector<3x6x6xf32>
      tpu.vector_store %arg6[%c0_65, %c0_66, %c0_67], %82 {strides = array<i32>} : memref<3x6x6xf32, #tpu.memory_space<vmem>>, vector<3x6x6xf32>,
    } else {
    }
    %c0 = arith.constant 0 : index
    %c0_1 = arith.constant 0 : index
    %3 = vector.load %arg3[%c0, %c0_1] : memref<6x256xf32, #tpu.memory_space<vmem>>, vector<6x256xf32>
    %c0_2 = arith.constant 0 : index
    %c0_3 = arith.constant 0 : index
    %4 = vector.load %arg4[%c0_2, %c0_3] : memref<6x1xf32, #tpu.memory_space<vmem>>, vector<6x1xf32>
    %c0_4 = arith.constant 0 : index
    %c0_5 = arith.constant 0 : index
    %c0_6 = arith.constant 0 : index
    %5 = vector.load %arg2[%c0_4, %c0_5, %c0_6] : memref<3x256x256xf32, #tpu.memory_space<vmem>>, vector<1x256x256xf32>
    %6 = vector.shape_cast %5 : vector<1x256x256xf32> to vector<256x256xf32>
    %cst = arith.constant dense<0.000000e+00> : vector<6x256xf32>
    %7 = tpu.matmul %3, %6, %cst {dimension_numbers = #tpu.dot_dimension_numbers<[1], [0], [0], [1], [0, 0, 1, 1], [], []>} : vector<6x256xf32>, vector<256x256xf32>, vector<6x256xf32> -> vector<6x256xf32>
    %8 = vector.broadcast %4 : vector<6x1xf32> to vector<6x256xf32>
    %9 = arith.addf %7, %8 : vector<6x256xf32>
    %10 = arith.negf %9 : vector<6x256xf32>
    %11 = math.exp %10 : vector<6x256xf32>
    %cst_7 = arith.constant 1.000000e+00 : f32
    %12 = vector.broadcast %cst_7 : f32 to vector<6x256xf32>
    %13 = arith.addf %12, %11 : vector<6x256xf32>
    %14 = arith.divf %12, %13 : vector<6x256xf32>
    %c0_8 = arith.constant 0 : index
    %c0_9 = arith.constant 0 : index
    %c0_10 = arith.constant 0 : index
    %15 = vector.load %arg5[%c0_8, %c0_9, %c0_10] : memref<3x6x256xf32, #tpu.memory_space<vmem>>, vector<1x6x256xf32>
    %16 = vector.shape_cast %15 : vector<1x6x256xf32> to vector<6x256xf32>
    %cst_11 = arith.constant dense<0.000000e+00> : vector<6x256xf32>
    %17 = tpu.matmul %14, %6, %cst_11 {dimension_numbers = #tpu.dot_dimension_numbers<[1], [1], [0], [0], [0, 0, 1, 0], [], []>} : vector<6x256xf32>, vector<256x256xf32>, vector<6x256xf32> -> vector<6x256xf32>
    %18 = arith.addf %16, %17 : vector<6x256xf32>
    %c0_12 = arith.constant 0 : index
    %c0_13 = arith.constant 0 : index
    %c0_14 = arith.constant 0 : index
    %19 = vector.load %arg5[%c0_12, %c0_13, %c0_14] : memref<3x6x256xf32, #tpu.memory_space<vmem>>, vector<1x6x256xf32>
    %20 = vector.shape_cast %19 : vector<1x6x256xf32> to vector<6x256xf32>
    %21 = vector.shape_cast %18 : vector<6x256xf32> to vector<1x6x256xf32>
    tpu.vector_store %arg5[%c0_12, %c0_13, %c0_14], %21 {strides = array<i32>} : memref<3x6x256xf32, #tpu.memory_space<vmem>>, vector<1x6x256xf32>,
    %c0_15 = arith.constant 0 : index
    %c0_16 = arith.constant 0 : index
    %c0_17 = arith.constant 0 : index
    %22 = vector.load %arg6[%c0_15, %c0_16, %c0_17] : memref<3x6x6xf32, #tpu.memory_space<vmem>>, vector<1x6x6xf32>
    %23 = vector.shape_cast %22 : vector<1x6x6xf32> to vector<6x6xf32>
    %cst_18 = arith.constant dense<0.000000e+00> : vector<6x6xf32>
    %24 = tpu.matmul %14, %14, %cst_18 {dimension_numbers = #tpu.dot_dimension_numbers<[1], [1], [0], [0], [0, 0, 1, 0], [], []>} : vector<6x256xf32>, vector<6x256xf32>, vector<6x6xf32> -> vector<6x6xf32>
    %25 = arith.addf %23, %24 : vector<6x6xf32>
    %c0_19 = arith.constant 0 : index
    %c0_20 = arith.constant 0 : index
    %c0_21 = arith.constant 0 : index
    %26 = vector.load %arg6[%c0_19, %c0_20, %c0_21] : memref<3x6x6xf32, #tpu.memory_space<vmem>>, vector<1x6x6xf32>
    %27 = vector.shape_cast %26 : vector<1x6x6xf32> to vector<6x6xf32>
    %28 = vector.shape_cast %25 : vector<6x6xf32> to vector<1x6x6xf32>
    tpu.vector_store %arg6[%c0_19, %c0_20, %c0_21], %28 {strides = array<i32>} : memref<3x6x6xf32, #tpu.memory_space<vmem>>, vector<1x6x6xf32>,
    %c1 = arith.constant 1 : index
    %c0_22 = arith.constant 0 : index
    %c0_23 = arith.constant 0 : index
    %29 = vector.load %arg2[%c1, %c0_22, %c0_23] : memref<3x256x256xf32, #tpu.memory_space<vmem>>, vector<1x256x256xf32>
    %30 = vector.shape_cast %29 : vector<1x256x256xf32> to vector<256x256xf32>
    %cst_24 = arith.constant dense<0.000000e+00> : vector<6x256xf32>
    %31 = tpu.matmul %3, %30, %cst_24 {dimension_numbers = #tpu.dot_dimension_numbers<[1], [0], [0], [1], [0, 0, 1, 1], [], []>} : vector<6x256xf32>, vector<256x256xf32>, vector<6x256xf32> -> vector<6x256xf32>
    %32 = vector.broadcast %4 : vector<6x1xf32> to vector<6x256xf32>
    %33 = arith.addf %31, %32 : vector<6x256xf32>
    %34 = arith.negf %33 : vector<6x256xf32>
    %35 = math.exp %34 : vector<6x256xf32>
    %cst_25 = arith.constant 1.000000e+00 : f32
    %36 = vector.broadcast %cst_25 : f32 to vector<6x256xf32>
    %37 = arith.addf %36, %35 : vector<6x256xf32>
    %38 = arith.divf %36, %37 : vector<6x256xf32>
    %c1_26 = arith.constant 1 : index
    %c0_27 = arith.constant 0 : index
    %c0_28 = arith.constant 0 : index
    %39 = vector.load %arg5[%c1_26, %c0_27, %c0_28] : memref<3x6x256xf32, #tpu.memory_space<vmem>>, vector<1x6x256xf32>
    %40 = vector.shape_cast %39 : vector<1x6x256xf32> to vector<6x256xf32>
    %cst_29 = arith.constant dense<0.000000e+00> : vector<6x256xf32>
    %41 = tpu.matmul %38, %30, %cst_29 {dimension_numbers = #tpu.dot_dimension_numbers<[1], [1], [0], [0], [0, 0, 1, 0], [], []>} : vector<6x256xf32>, vector<256x256xf32>, vector<6x256xf32> -> vector<6x256xf32>
    %42 = arith.addf %40, %41 : vector<6x256xf32>
    %c1_30 = arith.constant 1 : index
    %c0_31 = arith.constant 0 : index
    %c0_32 = arith.constant 0 : index
    %43 = vector.load %arg5[%c1_30, %c0_31, %c0_32] : memref<3x6x256xf32, #tpu.memory_space<vmem>>, vector<1x6x256xf32>
    %44 = vector.shape_cast %43 : vector<1x6x256xf32> to vector<6x256xf32>
    %45 = vector.shape_cast %42 : vector<6x256xf32> to vector<1x6x256xf32>
    tpu.vector_store %arg5[%c1_30, %c0_31, %c0_32], %45 {strides = array<i32>} : memref<3x6x256xf32, #tpu.memory_space<vmem>>, vector<1x6x256xf32>,
    %c1_33 = arith.constant 1 : index
    %c0_34 = arith.constant 0 : index
    %c0_35 = arith.constant 0 : index
    %46 = vector.load %arg6[%c1_33, %c0_34, %c0_35] : memref<3x6x6xf32, #tpu.memory_space<vmem>>, vector<1x6x6xf32>
    %47 = vector.shape_cast %46 : vector<1x6x6xf32> to vector<6x6xf32>
    %cst_36 = arith.constant dense<0.000000e+00> : vector<6x6xf32>
    %48 = tpu.matmul %38, %38, %cst_36 {dimension_numbers = #tpu.dot_dimension_numbers<[1], [1], [0], [0], [0, 0, 1, 0], [], []>} : vector<6x256xf32>, vector<6x256xf32>, vector<6x6xf32> -> vector<6x6xf32>
    %49 = arith.addf %47, %48 : vector<6x6xf32>
    %c1_37 = arith.constant 1 : index
    %c0_38 = arith.constant 0 : index
    %c0_39 = arith.constant 0 : index
    %50 = vector.load %arg6[%c1_37, %c0_38, %c0_39] : memref<3x6x6xf32, #tpu.memory_space<vmem>>, vector<1x6x6xf32>
    %51 = vector.shape_cast %50 : vector<1x6x6xf32> to vector<6x6xf32>
    %52 = vector.shape_cast %49 : vector<6x6xf32> to vector<1x6x6xf32>
    tpu.vector_store %arg6[%c1_37, %c0_38, %c0_39], %52 {strides = array<i32>} : memref<3x6x6xf32, #tpu.memory_space<vmem>>, vector<1x6x6xf32>,
    %c2 = arith.constant 2 : index
    %c0_40 = arith.constant 0 : index
    %c0_41 = arith.constant 0 : index
    %53 = vector.load %arg2[%c2, %c0_40, %c0_41] : memref<3x256x256xf32, #tpu.memory_space<vmem>>, vector<1x256x256xf32>
    %54 = vector.shape_cast %53 : vector<1x256x256xf32> to vector<256x256xf32>
    %cst_42 = arith.constant dense<0.000000e+00> : vector<6x256xf32>
    %55 = tpu.matmul %3, %54, %cst_42 {dimension_numbers = #tpu.dot_dimension_numbers<[1], [0], [0], [1], [0, 0, 1, 1], [], []>} : vector<6x256xf32>, vector<256x256xf32>, vector<6x256xf32> -> vector<6x256xf32>
    %56 = vector.broadcast %4 : vector<6x1xf32> to vector<6x256xf32>
    %57 = arith.addf %55, %56 : vector<6x256xf32>
    %58 = arith.negf %57 : vector<6x256xf32>
    %59 = math.exp %58 : vector<6x256xf32>
    %cst_43 = arith.constant 1.000000e+00 : f32
    %60 = vector.broadcast %cst_43 : f32 to vector<6x256xf32>
    %61 = arith.addf %60, %59 : vector<6x256xf32>
    %62 = arith.divf %60, %61 : vector<6x256xf32>
    %c2_44 = arith.constant 2 : index
    %c0_45 = arith.constant 0 : index
    %c0_46 = arith.constant 0 : index
    %63 = vector.load %arg5[%c2_44, %c0_45, %c0_46] : memref<3x6x256xf32, #tpu.memory_space<vmem>>, vector<1x6x256xf32>
    %64 = vector.shape_cast %63 : vector<1x6x256xf32> to vector<6x256xf32>
    %cst_47 = arith.constant dense<0.000000e+00> : vector<6x256xf32>
    %65 = tpu.matmul %62, %54, %cst_47 {dimension_numbers = #tpu.dot_dimension_numbers<[1], [1], [0], [0], [0, 0, 1, 0], [], []>} : vector<6x256xf32>, vector<256x256xf32>, vector<6x256xf32> -> vector<6x256xf32>
    %66 = arith.addf %64, %65 : vector<6x256xf32>
    %c2_48 = arith.constant 2 : index
    %c0_49 = arith.constant 0 : index
    %c0_50 = arith.constant 0 : index
    %67 = vector.load %arg5[%c2_48, %c0_49, %c0_50] : memref<3x6x256xf32, #tpu.memory_space<vmem>>, vector<1x6x256xf32>
    %68 = vector.shape_cast %67 : vector<1x6x256xf32> to vector<6x256xf32>
    %69 = vector.shape_cast %66 : vector<6x256xf32> to vector<1x6x256xf32>
    tpu.vector_store %arg5[%c2_48, %c0_49, %c0_50], %69 {strides = array<i32>} : memref<3x6x256xf32, #tpu.memory_space<vmem>>, vector<1x6x256xf32>,
    %c2_51 = arith.constant 2 : index
    %c0_52 = arith.constant 0 : index
    %c0_53 = arith.constant 0 : index
    %70 = vector.load %arg6[%c2_51, %c0_52, %c0_53] : memref<3x6x6xf32, #tpu.memory_space<vmem>>, vector<1x6x6xf32>
    %71 = vector.shape_cast %70 : vector<1x6x6xf32> to vector<6x6xf32>
    %cst_54 = arith.constant dense<0.000000e+00> : vector<6x6xf32>
    %72 = tpu.matmul %62, %62, %cst_54 {dimension_numbers = #tpu.dot_dimension_numbers<[1], [1], [0], [0], [0, 0, 1, 0], [], []>} : vector<6x256xf32>, vector<6x256xf32>, vector<6x6xf32> -> vector<6x6xf32>
    %73 = arith.addf %71, %72 : vector<6x6xf32>
    %c2_55 = arith.constant 2 : index
    %c0_56 = arith.constant 0 : index
    %c0_57 = arith.constant 0 : index
    %74 = vector.load %arg6[%c2_55, %c0_56, %c0_57] : memref<3x6x6xf32, #tpu.memory_space<vmem>>, vector<1x6x6xf32>
    %75 = vector.shape_cast %74 : vector<1x6x6xf32> to vector<6x6xf32>
    %76 = vector.shape_cast %73 : vector<6x6xf32> to vector<1x6x6xf32>
    tpu.vector_store %arg6[%c2_55, %c0_56, %c0_57], %76 {strides = array<i32>} : memref<3x6x6xf32, #tpu.memory_space<vmem>>, vector<1x6x6xf32>,
    %c0_i32_58 = arith.constant 0 : i32
    %77 = arith.cmpi eq, %arg1, %c0_i32_58 : i32
    %78 = arith.extui %77 : i1 to i32
    %c0_i32_59 = arith.constant 0 : i32
    %79 = arith.cmpi ne, %78, %c0_i32_59 : i32
    scf.if %79 {
      %c0_60 = arith.constant 0 : index
      %c0_61 = arith.constant 0 : index
      %c0_62 = arith.constant 0 : index
      %80 = vector.load %arg5[%c0_60, %c0_61, %c0_62] : memref<3x6x256xf32, #tpu.memory_space<vmem>>, vector<3x6x256xf32>
      %cst_63 = arith.constant 3.906250e-03 : f32
      %81 = vector.broadcast %cst_63 : f32 to vector<3x6x256xf32>
      %82 = arith.mulf %80, %81 : vector<3x6x256xf32>
      %c0_64 = arith.constant 0 : index
      %c0_65 = arith.constant 0 : index
      %c0_66 = arith.constant 0 : index
      %83 = vector.load %arg5[%c0_64, %c0_65, %c0_66] : memref<3x6x256xf32, #tpu.memory_space<vmem>>, vector<3x6x256xf32>
      tpu.vector_store %arg5[%c0_64, %c0_65, %c0_66], %82 {strides = array<i32>} : memref<3x6x256xf32, #tpu.memory_space<vmem>>, vector<3x6x256xf32>,
    } else {
    }
    return
  }
  func.func @transform_0(%arg0: i32, %arg1: i32) -> (i32, i32, i32) {
    %c0_i32 = arith.constant 0 : i32
    %c0_i32_0 = arith.constant 0 : i32
    return %arg0, %c0_i32, %arg1 : i32, i32, i32
  }
  func.func @transform_1(%arg0: i32, %arg1: i32) -> (i32, i32) {
    %c0_i32 = arith.constant 0 : i32
    %c0_i32_0 = arith.constant 0 : i32
    %c0_i32_1 = arith.constant 0 : i32
    return %c0_i32, %c0_i32_0 : i32, i32
  }
  func.func @transform_2(%arg0: i32, %arg1: i32) -> (i32, i32) {
    %c0_i32 = arith.constant 0 : i32
    %c0_i32_0 = arith.constant 0 : i32
    %c0_i32_1 = arith.constant 0 : i32
    return %c0_i32, %c0_i32_0 : i32, i32
  }
  func.func @transform_3(%arg0: i32, %arg1: i32) -> (i32, i32, i32) {
    %c0_i32 = arith.constant 0 : i32
    %c0_i32_0 = arith.constant 0 : i32
    %c0_i32_1 = arith.constant 0 : i32
    return %arg0, %c0_i32, %c0_i32_0 : i32, i32, i32
  }
  func.func @transform_4(%arg0: i32, %arg1: i32) -> (i32, i32, i32) {
    %c0_i32 = arith.constant 0 : i32
    %c0_i32_0 = arith.constant 0 : i32
    %c0_i32_1 = arith.constant 0 : i32
    return %arg0, %c0_i32, %c0_i32_0 : i32, i32, i32
  }
}

</mosaic_0001>

<llo_original>
// kernel: cossim_forward.1
$region0: #{cossim_forward.1}
  #allocation0 [shape = 'u32[]', space=smem, size = 0x4, offset = 0x4, fixed_abs, tag = 'smem constant byte address 0x4 - core index']
  #allocation1 [shape = 'u32[144,128]{1,0:T(1,128)}', space=vmem, size = 0x12000, scoped, tag = 'internal scratch']
  %s0 = inlined_call_operand.vmem [shape: f32[6,256,256], index: 0, kind: input, shape index: {}]
  %s1 = inlined_call_operand.vmem [shape: f32[6,256], index: 1, kind: input, shape index: {}]
  %s2 = inlined_call_operand.vmem [shape: f32[6,1], index: 2, kind: input, shape index: {}]
  %s3 = inlined_call_operand.vmem [shape: f32[6,6,256], index: 3, kind: output, shape index: {0}]
  %s4 = inlined_call_operand.vmem [shape: f32[6,6,6], index: 4, kind: output, shape index: {1}]
  %5 = xla_tuple %s3, %s4
  %s6 = sld [smem:[#allocation0]]
  $region61: #{cossim_forward.1} parent=0
    _
  %s8 = ssub.s32 1, %s6
  %s9 = scalar_select 0, %s8, %s6
  loop: start=0, step=1, limit=4
  $region2: #{cossim_forward.1} parent=0 // loop_pre_header
    _
  $region3: #{cossim_forward.1} parent=0 // loop_header
    %s11 = sphi 0, %s15
    %p12 = scmp.ge.s32.totalorder %s11, 4
    %s18 = sphi 0, %s30
    %s19 = sphi 0, %s26
    %s20 = sphi 0, %s18
    %s21 = sphi 0, %s19
    %s22 = sphi 0, %s20
    %s23 = sphi 0, %s21
    %s35 = sphi 0, %s37
    %s38 = sphi 0, %s35
    %s39 = sphi 0, %s38
    %s55 = sphi 0, %s39
    %s59 = sphi 0, %s59
    %s61 = sphi 0, %s59
    %s62 = sphi 0, %s61
    %s76 = sphi 0, %s62
    %s80 = sphi 0, %s80
    %s82 = sphi 0, %s80
    %s83 = sphi 0, %s82
    %s97 = sphi 0, %s83
    %s103 = sphi 0, %s105
    %s106 = sphi 0, %s103
    %s107 = sphi 0, %s106
    %s123 = sphi 0, %s107
    %s129 = sphi 0, %s131
    %s132 = sphi 0, %s129
    %s133 = sphi 0, %s132
    %s149 = sphi 0, %s133
  $region4: #{cossim_forward.1} parent=0 // loop_header_branch
    %14 = sbr.rel (%p12) target = $region8
  $region5: #{cossim_forward.1} parent=0 // loop_body
    %s16 = ssub.s32 %s11, 1
    %s17 = ssub.s32 %s11, 2
    %s24 = sadd.s32 1, %s19
    %p25 = scmp.ge.s32.totalorder %s24, 1
    %s26 = scalar_select %p25, 0, %s24
    %s27 = sadd.s32 1, %s18
    %s28 = scalar_select %p25, %s27, %s18
    %p29 = scmp.ge.s32.totalorder %s28, 2
    %s30 = scalar_select %p29, 0, %s28
    %s31 = ssub.s32 %s18, %s30
    %s32 = ssub.s32 %s19, %s26
    %s33 = sor.u32 %s31, %s32
    %p34 = scmp.eq.s32.totalorder %s33, 0
    %s36 = sadd.s32 %s35, 1
    %s37 = scalar_select %p34, %s35, %s36
    %p40 = pneg %p34
    %p41 = scmp.eq.s32.totalorder %s11, 1
    %p42 = por %p40, %p41
    %p43 = scmp.ne.s32.totalorder %s35, %s38
    %p44 = scmp.eq.s32.totalorder %s11, 0
    %p45 = por %p43, %p44
    %p46 = scmp.ne.s32.totalorder %s35, %s38
    %p47 = scmp.eq.s32.totalorder %s16, 1
    %p48 = por %p46, %p47
    %p49 = scmp.ne.s32.totalorder %s38, %s39
    %p50 = scmp.eq.s32.totalorder %s16, 0
    %p51 = por %p49, %p50
    %p52 = scmp.ne.s32.totalorder %s38, %s39
    %p53 = scmp.eq.s32.totalorder %s17, 1
    %p54 = por %p52, %p53
    %p56 = scmp.ne.s32.totalorder %s39, %s55
    %p57 = scmp.eq.s32.totalorder %s17, 0
    %p58 = por %p56, %p57
    %s60 = sadd.s32 %s59, 1
    %p63 = scmp.eq.s32.totalorder %s11, 1
    %p64 = scmp.ne.s32.totalorder %s59, %s61
    %p65 = scmp.eq.s32.totalorder %s11, 0
    %p66 = por %p64, %p65
    %p67 = scmp.ne.s32.totalorder %s59, %s61
    %p68 = scmp.eq.s32.totalorder %s16, 1
    %p69 = por %p67, %p68
    %p70 = scmp.ne.s32.totalorder %s61, %s62
    %p71 = scmp.eq.s32.totalorder %s16, 0
    %p72 = por %p70, %p71
    %p73 = scmp.ne.s32.totalorder %s61, %s62
    %p74 = scmp.eq.s32.totalorder %s17, 1
    %p75 = por %p73, %p74
    %p77 = scmp.ne.s32.totalorder %s62, %s76
    %p78 = scmp.eq.s32.totalorder %s17, 0
    %p79 = por %p77, %p78
    %s81 = sadd.s32 %s80, 1
    %p84 = scmp.eq.s32.totalorder %s11, 1
    %p85 = scmp.ne.s32.totalorder %s80, %s82
    %p86 = scmp.eq.s32.totalorder %s11, 0
    %p87 = por %p85, %p86
    %p88 = scmp.ne.s32.totalorder %s80, %s82
    %p89 = scmp.eq.s32.totalorder %s16, 1
    %p90 = por %p88, %p89
    %p91 = scmp.ne.s32.totalorder %s82, %s83
    %p92 = scmp.eq.s32.totalorder %s16, 0
    %p93 = por %p91, %p92
    %p94 = scmp.ne.s32.totalorder %s82, %s83
    %p95 = scmp.eq.s32.totalorder %s17, 1
    %p96 = por %p94, %p95
    %p98 = scmp.ne.s32.totalorder %s83, %s97
    %p99 = scmp.eq.s32.totalorder %s17, 0
    %p100 = por %p98, %p99
    %s101 = ssub.s32 %s18, %s30
    %p102 = scmp.eq.s32.totalorder %s101, 0
    %s104 = sadd.s32 %s103, 1
    %s105 = scalar_select %p102, %s103, %s104
    %p108 = pneg %p102
    %p109 = scmp.eq.s32.totalorder %s11, 1
    %p110 = por %p108, %p109
    %p111 = scmp.ne.s32.totalorder %s103, %s106
    %p112 = scmp.eq.s32.totalorder %s11, 0
    %p113 = por %p111, %p112
    %p114 = scmp.ne.s32.totalorder %s103, %s106
    %p115 = scmp.eq.s32.totalorder %s16, 1
    %p116 = por %p114, %p115
    %p117 = scmp.ne.s32.totalorder %s106, %s107
    %p118 = scmp.eq.s32.totalorder %s16, 0
    %p119 = por %p117, %p118
    %p120 = scmp.ne.s32.totalorder %s106, %s107
    %p121 = scmp.eq.s32.totalorder %s17, 1
    %p122 = por %p120, %p121
    %p124 = scmp.ne.s32.totalorder %s107, %s123
    %p125 = scmp.eq.s32.totalorder %s17, 0
    %p126 = por %p124, %p125
    %s127 = ssub.s32 %s18, %s30
    %p128 = scmp.eq.s32.totalorder %s127, 0
    %s130 = sadd.s32 %s129, 1
    %s131 = scalar_select %p128, %s129, %s130
    %p134 = pneg %p128
    %p135 = scmp.eq.s32.totalorder %s11, 1
    %p136 = por %p134, %p135
    %p137 = scmp.ne.s32.totalorder %s129, %s132
    %p138 = scmp.eq.s32.totalorder %s11, 0
    %p139 = por %p137, %p138
    %p140 = scmp.ne.s32.totalorder %s129, %s132
    %p141 = scmp.eq.s32.totalorder %s16, 1
    %p142 = por %p140, %p141
    %p143 = scmp.ne.s32.totalorder %s132, %s133
    %p144 = scmp.eq.s32.totalorder %s16, 0
    %p145 = por %p143, %p144
    %p146 = scmp.ne.s32.totalorder %s132, %s133
    %p147 = scmp.eq.s32.totalorder %s17, 1
    %p148 = por %p146, %p147
    %p150 = scmp.ne.s32.totalorder %s133, %s149
    %p151 = scmp.eq.s32.totalorder %s17, 0
    %p152 = por %p150, %p151
    %p153 = scmp.le.s32.totalorder 1, %s11
    %p154 = scmp.lt.s32.totalorder %s11, 3
    %p155 = pnand %p153, %p154
    %p156 = pneg %p155
    // Predicated region
    $region9: #{cossim_forward.1} parent=5 // pred_check
      _
    $region10: #{cossim_forward.1} parent=5 // pred_check_branch
      %158 = sbr.rel (%p155) target = $region12
    $region11: #{cossim_forward.1} parent=5 // pred_region
      %s159 = ssub.s32 %s11, 1
      // Predicated region
      $region13: #{cossim_forward.1} parent=11 // pred_check
        %p160 = pneg %p72
      $region14: #{cossim_forward.1} parent=11 // pred_check_branch
        %162 = sbr.rel (%p160) target = $region16
      $region15: #{cossim_forward.1} parent=11 // pred_region
        _
      $region16: #{cossim_forward.1} parent=11 // pred_fallthru
        _
      // Predicated region
      $region17: #{cossim_forward.1} parent=11 // pred_check
        %p163 = pneg %p93
      $region18: #{cossim_forward.1} parent=11 // pred_check_branch
        %165 = sbr.rel (%p163) target = $region20
      $region19: #{cossim_forward.1} parent=11 // pred_region
        _
      $region20: #{cossim_forward.1} parent=11 // pred_fallthru
        _
    $region12: #{cossim_forward.1} parent=5 // pred_fallthru
      _
    %p166 = scmp.lt.s32.totalorder %s11, 2
    // Predicated region
    $region21: #{cossim_forward.1} parent=5 // pred_check
      %p167 = pneg %p166
    $region22: #{cossim_forward.1} parent=5 // pred_check_branch
      %169 = sbr.rel (%p167) target = $region24
    $region23: #{cossim_forward.1} parent=5 // pred_region
      // Predicated region
      $region25: #{cossim_forward.1} parent=23 // pred_check
        %p170 = pneg %p45
      $region26: #{cossim_forward.1} parent=23 // pred_check_branch
        %172 = sbr.rel (%p170) target = $region28
      $region27: #{cossim_forward.1} parent=23 // pred_region
        %s173 = smul.u32 3, %s18
        %s174 = smul.u32 2, %s19
        %p175 = scmp.lt.s32.totalorder %s173, 5
        %s176 = scalar_select %p175, %s173, 5
        %p177 = scmp.lt.s32.totalorder %s174, 1
        %s178 = scalar_select %p177, %s174, 1
        %s179 = smul.addr %s176, 64
        %s180 = sadd.s32 %s178, %s179
        %s181 = smul.addr %s180, 8
        %s182 = scalar_lea.vmem %s0, %s181
        %s183 = smul.u32 3, %s18
        %s184 = smul.u32 2, %s19
      $region28: #{cossim_forward.1} parent=23 // pred_fallthru
        _
    $region24: #{cossim_forward.1} parent=5 // pred_fallthru
      _
    %p185 = scmp.le.s32.totalorder 1, %s11
    %p186 = scmp.lt.s32.totalorder %s11, 3
    %p187 = pnand %p185, %p186
    %p188 = pneg %p187
    // Predicated region
    $region29: #{cossim_forward.1} parent=5 // pred_check
      _
    $region30: #{cossim_forward.1} parent=5 // pred_check_branch
      %190 = sbr.rel (%p187) target = $region32
    $region31: #{cossim_forward.1} parent=5 // pred_region
      %s191 = ssub.s32 %s11, 1
      %s192 = smul.u32 3, %s20
      %s193 = smul.u32 2, %s21
      %p194 = scmp.lt.s32.totalorder %s192, 5
      %s195 = scalar_select %p194, %s192, 5
      %p196 = scmp.lt.s32.totalorder %s193, 1
      %s197 = scalar_select %p196, %s193, 1
      %s198 = smul.addr %s195, 64
      %s199 = sadd.s32 %s197, %s198
      %s200 = smul.addr %s199, 8
      %s201 = scalar_lea.vmem %s0, %s200
      %p202 = pneg %p51
      %p203 = pneg %p48
      %p204 = pneg %p72
      %p205 = pneg %p69
      %p206 = pneg %p93
      %p207 = pneg %p90
      %p208 = pneg %p119
      %p209 = pneg %p116
      %s210 = smul.u32 3, %s20
      %p211 = scmp.lt.s32.totalorder %s210, 5
      %s212 = scalar_select %p211, %s210, 5
      %s213 = smul.addr %s212, 2
      %s214 = smul.addr %s213, 8
      %s215 = scalar_lea.vmem %s3, %s214
      %p216 = pneg %p145
      %p217 = pneg %p142
      %s218 = smul.u32 3, %s20
      %p219 = scmp.lt.s32.totalorder %s218, 5
      %s220 = scalar_select %p219, %s218, 5
      %s221 = smul.addr %s220, 8
      %s222 = scalar_lea.vmem %s4, %s221
      %s223 = smul.u32 3, %s20
      %s224 = smul.u32 2, %s21
      %p225 = scmp.lt.s32.totalorder %s223, 5
      %s226 = scalar_select %p225, %s223, 5
      %p227 = scmp.lt.s32.totalorder %s224, 1
      %s228 = scalar_select %p227, %s224, 1
      %s229 = smul.addr %s226, 64
      %s230 = sadd.s32 %s228, %s229
      %s231 = smul.addr %s230, 8
      %s232 = scalar_lea.vmem %s0, %s231
      %s233 = smul.u32 3, %s20
      %s234 = smul.u32 2, %s21
      %s235 = smul.u32 3, %s20
      %p236 = scmp.lt.s32.totalorder %s235, 5
      %s237 = scalar_select %p236, %s235, 5
      %s238 = smul.addr %s237, 2
      %s239 = smul.addr %s238, 8
      %s240 = scalar_lea.vmem %s3, %s239
      %s241 = smul.u32 3, %s20
      %s242 = smul.u32 3, %s20
      %p243 = scmp.lt.s32.totalorder %s242, 5
      %s244 = scalar_select %p243, %s242, 5
      %s245 = smul.addr %s244, 8
      %s246 = scalar_lea.vmem %s4, %s245
      %s247 = smul.u32 3, %s20
      %p248 = scmp.eq.s32.totalorder %s21, 0
      // Predicated region
      $region33: #{cossim_forward.1} parent=31 // pred_check
        %p249 = pneg %p248
      $region34: #{cossim_forward.1} parent=31 // pred_check_branch
        %251 = sbr.rel (%p249) target = $region36
      $region35: #{cossim_forward.1} parent=31 // pred_region
        %252 = vst [vmem:[%s240] sm:$0x3f] 0.0
        %253 = vst [vmem:[%s240 + $0x8] sm:$0x3f] 0.0
        %254 = vst [vmem:[%s240 + $0x10] sm:$0x3f] 0.0
        %255 = vst [vmem:[%s240 + $0x18] sm:$0x3f] 0.0
        %256 = vst [vmem:[%s240 + $0x20] sm:$0x3f] 0.0
        %257 = vst [vmem:[%s240 + $0x28] sm:$0x3f] 0.0
        %vm258 = vcmask 46080
        %259 = vst.msk [vmem:[%s246] sm:$0x3f] %vm258, 0.0
        %260 = vst.msk [vmem:[%s246 + $0x8] sm:$0x3f] %vm258, 0.0
        %261 = vst.msk [vmem:[%s246 + $0x10] sm:$0x3f] %vm258, 0.0
      $region36: #{cossim_forward.1} parent=31 // pred_fallthru
        _
      %v262 = vld [vmem:[%s1] sm:$0x3f]
      %v263 = vld [vmem:[%s1 + $0x8] sm:$0x3f]
      %v264 = vld [vmem:[%s2] sm:$0x3f]
      %v265 = vld [vmem:[%s232] sm:$0xff]
      %v266 = vld [vmem:[%s232 + $0x8] sm:$0xff]
      %v267 = vld [vmem:[%s232 + $0x10] sm:$0xff]
      %v268 = vld [vmem:[%s232 + $0x18] sm:$0xff]
      %v269 = vld [vmem:[%s232 + $0x20] sm:$0xff]
      %v270 = vld [vmem:[%s232 + $0x28] sm:$0xff]
      %v271 = vld [vmem:[%s232 + $0x30] sm:$0xff]
      %v272 = vld [vmem:[%s232 + $0x38] sm:$0xff]
      %v273 = vld [vmem:[%s232 + $0x40] sm:$0xff]
      %v274 = vld [vmem:[%s232 + $0x48] sm:$0xff]
      %v275 = vld [vmem:[%s232 + $0x50] sm:$0xff]
      %v276 = vld [vmem:[%s232 + $0x58] sm:$0xff]
      %v277 = vld [vmem:[%s232 + $0x60] sm:$0xff]
      %v278 = vld [vmem:[%s232 + $0x68] sm:$0xff]
      %v279 = vld [vmem:[%s232 + $0x70] sm:$0xff]
      %v280 = vld [vmem:[%s232 + $0x78] sm:$0xff]
      %v281 = vld [vmem:[%s232 + $0x80] sm:$0xff]
      %v282 = vld [vmem:[%s232 + $0x88] sm:$0xff]
      %v283 = vld [vmem:[%s232 + $0x90] sm:$0xff]
      %v284 = vld [vmem:[%s232 + $0x98] sm:$0xff]
      %v285 = vld [vmem:[%s232 + $0xa0] sm:$0xff]
      %v286 = vld [vmem:[%s232 + $0xa8] sm:$0xff]
      %v287 = vld [vmem:[%s232 + $0xb0] sm:$0xff]
      %v288 = vld [vmem:[%s232 + $0xb8] sm:$0xff]
      %v289 = vld [vmem:[%s232 + $0xc0] sm:$0xff]
      %v290 = vld [vmem:[%s232 + $0xc8] sm:$0xff]
      %v291 = vld [vmem:[%s232 + $0xd0] sm:$0xff]
      %v292 = vld [vmem:[%s232 + $0xd8] sm:$0xff]
      %v293 = vld [vmem:[%s232 + $0xe0] sm:$0xff]
      %v294 = vld [vmem:[%s232 + $0xe8] sm:$0xff]
      %v295 = vld [vmem:[%s232 + $0xf0] sm:$0xff]
      %v296 = vld [vmem:[%s232 + $0xf8] sm:$0xff]
      %v297 = vld [vmem:[%s232 + $0x100] sm:$0xff]
      %v298 = vld [vmem:[%s232 + $0x108] sm:$0xff]
      %v299 = vld [vmem:[%s232 + $0x110] sm:$0xff]
      %v300 = vld [vmem:[%s232 + $0x118] sm:$0xff]
      %v301 = vld [vmem:[%s232 + $0x120] sm:$0xff]
      %v302 = vld [vmem:[%s232 + $0x128] sm:$0xff]
      %v303 = vld [vmem:[%s232 + $0x130] sm:$0xff]
      %v304 = vld [vmem:[%s232 + $0x138] sm:$0xff]
      %v305 = vld [vmem:[%s232 + $0x140] sm:$0xff]
      %v306 = vld [vmem:[%s232 + $0x148] sm:$0xff]
      %v307 = vld [vmem:[%s232 + $0x150] sm:$0xff]
      %v308 = vld [vmem:[%s232 + $0x158] sm:$0xff]
      %v309 = vld [vmem:[%s232 + $0x160] sm:$0xff]
      %v310 = vld [vmem:[%s232 + $0x168] sm:$0xff]
      %v311 = vld [vmem:[%s232 + $0x170] sm:$0xff]
      %v312 = vld [vmem:[%s232 + $0x178] sm:$0xff]
      %v313 = vld [vmem:[%s232 + $0x180] sm:$0xff]
      %v314 = vld [vmem:[%s232 + $0x188] sm:$0xff]
      %v315 = vld [vmem:[%s232 + $0x190] sm:$0xff]
      %v316 = vld [vmem:[%s232 + $0x198] sm:$0xff]
      %v317 = vld [vmem:[%s232 + $0x1a0] sm:$0xff]
      %v318 = vld [vmem:[%s232 + $0x1a8] sm:$0xff]
      %v319 = vld [vmem:[%s232 + $0x1b0] sm:$0xff]
      %v320 = vld [vmem:[%s232 + $0x1b8] sm:$0xff]
      %v321 = vld [vmem:[%s232 + $0x1c0] sm:$0xff]
      %v322 = vld [vmem:[%s232 + $0x1c8] sm:$0xff]
      %v323 = vld [vmem:[%s232 + $0x1d0] sm:$0xff]
      %v324 = vld [vmem:[%s232 + $0x1d8] sm:$0xff]
      %v325 = vld [vmem:[%s232 + $0x1e0] sm:$0xff]
      %v326 = vld [vmem:[%s232 + $0x1e8] sm:$0xff]
      %v327 = vld [vmem:[%s232 + $0x1f0] sm:$0xff]
      %v328 = vld [vmem:[%s232 + $0x1f8] sm:$0xff]
      %330 = vset.pattern.permute.xlu0 0
      %331 = vperm.xlu0 %330, %v264
      %v332 = vpop.permute.xlu0 %331
      %334 = vmatprep.subr.mxu0 %v266
      %335 = vmatpush1.msra.mxu0 %v265
      %336 = vmatprep.subr.mxu0 %v268
      %337 = vmatpush1.msra.mxu0 %v267
      %338 = vmatprep.subr.mxu0 %v270
      %339 = vmatpush1.msra.mxu0 %v269
      %340 = vmatprep.subr.mxu0 %v272
      %341 = vmatpush1.msra.mxu0 %v271
      %342 = vmatprep.subr.mxu0 %v274
      %343 = vmatpush1.msra.mxu0 %v273
      %344 = vmatprep.subr.mxu0 %v276
      %345 = vmatpush1.msra.mxu0 %v275
      %346 = vmatprep.subr.mxu0 %v278
      %347 = vmatpush1.msra.mxu0 %v277
      %348 = vmatprep.subr.mxu0 %v280
      %349 = vmatpush1.msra.mxu0 %v279
      %350 = vmatprep.subr.mxu0 %v282
      %351 = vmatpush1.msra.mxu0 %v281
      %352 = vmatprep.subr.mxu0 %v284
      %353 = vmatpush1.msra.mxu0 %v283
      %354 = vmatprep.subr.mxu0 %v286
      %355 = vmatpush1.msra.mxu0 %v285
      %356 = vmatprep.subr.mxu0 %v288
      %357 = vmatpush1.msra.mxu0 %v287
      %358 = vmatprep.subr.mxu0 %v290
      %359 = vmatpush1.msra.mxu0 %v289
      %360 = vmatprep.subr.mxu0 %v292
      %361 = vmatpush1.msra.mxu0 %v291
      %362 = vmatprep.subr.mxu0 %v294
      %363 = vmatpush1.msra.mxu0 %v293
      %364 = vmatprep.subr.mxu0 %v296
      %365 = vmatpush1.msra.mxu0 %v295
      %366 = vmatprep.subr.mxu0 %v298
      %367 = vmatpush1.msra.mxu0 %v297
      %368 = vmatprep.subr.mxu0 %v300
      %369 = vmatpush1.msra.mxu0 %v299
      %370 = vmatprep.subr.mxu0 %v302
      %371 = vmatpush1.msra.mxu0 %v301
      %372 = vmatprep.subr.mxu0 %v304
      %373 = vmatpush1.msra.mxu0 %v303
      %374 = vmatprep.subr.mxu0 %v306
      %375 = vmatpush1.msra.mxu0 %v305
      %376 = vmatprep.subr.mxu0 %v308
      %377 = vmatpush1.msra.mxu0 %v307
      %378 = vmatprep.subr.mxu0 %v310
      %379 = vmatpush1.msra.mxu0 %v309
      %380 = vmatprep.subr.mxu0 %v312
      %381 = vmatpush1.msra.mxu0 %v311
      %382 = vmatprep.subr.mxu0 %v314
      %383 = vmatpush1.msra.mxu0 %v313
      %384 = vmatprep.subr.mxu0 %v316
      %385 = vmatpush1.msra.mxu0 %v315
      %386 = vmatprep.subr.mxu0 %v318
      %387 = vmatpush1.msra.mxu0 %v317
      %388 = vmatprep.subr.mxu0 %v320
      %389 = vmatpush1.msra.mxu0 %v319
      %390 = vmatprep.subr.mxu0 %v322
      %391 = vmatpush1.msra.mxu0 %v321
      %392 = vmatprep.subr.mxu0 %v324
      %393 = vmatpush1.msra.mxu0 %v323
      %394 = vmatprep.subr.mxu0 %v326
      %395 = vmatpush1.msra.mxu0 %v325
      %396 = vmatprep.subr.mxu0 %v328
      %397 = vmatpush1.msra.mxu0 %v327
      %398 = vmatprep.mubr.f32.mxu0 %v263
      %399 = vmatmul.mubr.f32.gmra.mrb[0].mxu0 %v262
      %v400 = vpop.f32.mrb[0].mxu0
      %v401 = vadd.f32 %v332, %v400
      %v402 = vpop.f32.mrb[0].mxu0
      %v403 = vadd.f32 %v332, %v402
      %404 = vdwg.mxu0
      %v405 = vxor.u32 %v401, 2147483648
      %v406 = vxor.u32 %v403, 2147483648
      %v407 = vmul.f32 %v405, 1.442695
      %v408 = vpow.pop %v407
      %v409 = vmul.f32 %v406, 1.442695
      %v410 = vpow.pop %v409
      %v411 = vadd.f32 %v408, 1.0
      %v412 = vadd.f32 %v410, 1.0
      %v413 = vrcp.pop %v411
      %v414 = vmul.f32 1.0, %v413
      %v415 = vrcp.pop %v412
      %v416 = vmul.f32 1.0, %v415
      %v417 = vld [vmem:[%s240] sm:$0x3f]
      %v418 = vld [vmem:[%s240 + $0x8] sm:$0x3f]
      %419 = vmatprep.subr.mxu0 %v266
      %420 = vmatpush1.xpose.msra.mxu0 %v265
      %421 = vmatprep.subr.mxu0 %v268
      %422 = vmatpush1.xpose.msra.mxu0 %v267
      %423 = vmatprep.subr.mxu0 %v270
      %424 = vmatpush1.xpose.msra.mxu0 %v269
      %425 = vmatprep.subr.mxu0 %v272
      %426 = vmatpush1.xpose.msra.mxu0 %v271
      %427 = vmatprep.subr.mxu0 %v274
      %428 = vmatpush1.xpose.msra.mxu0 %v273
      %429 = vmatprep.subr.mxu0 %v276
      %430 = vmatpush1.xpose.msra.mxu0 %v275
      %431 = vmatprep.subr.mxu0 %v278
      %432 = vmatpush1.xpose.msra.mxu0 %v277
      %433 = vmatprep.subr.mxu0 %v280
      %434 = vmatpush1.xpose.msra.mxu0 %v279
      %435 = vmatprep.subr.mxu0 %v282
      %436 = vmatpush1.xpose.msra.mxu0 %v281
      %437 = vmatprep.subr.mxu0 %v284
      %438 = vmatpush1.xpose.msra.mxu0 %v283
      %439 = vmatprep.subr.mxu0 %v286
      %440 = vmatpush1.xpose.msra.mxu0 %v285
      %441 = vmatprep.subr.mxu0 %v288
      %442 = vmatpush1.xpose.msra.mxu0 %v287
      %443 = vmatprep.subr.mxu0 %v290
      %444 = vmatpush1.xpose.msra.mxu0 %v289
      %445 = vmatprep.subr.mxu0 %v292
      %446 = vmatpush1.xpose.msra.mxu0 %v291
      %447 = vmatprep.subr.mxu0 %v294
      %448 = vmatpush1.xpose.msra.mxu0 %v293
      %449 = vmatprep.subr.mxu0 %v296
      %450 = vmatpush1.xpose.msra.mxu0 %v295
      %451 = vmatprep.subr.mxu0 %v298
      %452 = vmatpush1.xpose.msra.mxu0 %v297
      %453 = vmatprep.subr.mxu0 %v300
      %454 = vmatpush1.xpose.msra.mxu0 %v299
      %455 = vmatprep.subr.mxu0 %v302
      %456 = vmatpush1.xpose.msra.mxu0 %v301
      %457 = vmatprep.subr.mxu0 %v304
      %458 = vmatpush1.xpose.msra.mxu0 %v303
      %459 = vmatprep.subr.mxu0 %v306
      %460 = vmatpush1.xpose.msra.mxu0 %v305
      %461 = vmatprep.subr.mxu0 %v308
      %462 = vmatpush1.xpose.msra.mxu0 %v307
      %463 = vmatprep.subr.mxu0 %v310
      %464 = vmatpush1.xpose.msra.mxu0 %v309
      %465 = vmatprep.subr.mxu0 %v312
      %466 = vmatpush1.xpose.msra.mxu0 %v311
      %467 = vmatprep.subr.mxu0 %v314
      %468 = vmatpush1.xpose.msra.mxu0 %v313
      %469 = vmatprep.subr.mxu0 %v316
      %470 = vmatpush1.xpose.msra.mxu0 %v315
      %471 = vmatprep.subr.mxu0 %v318
      %472 = vmatpush1.xpose.msra.mxu0 %v317
      %473 = vmatprep.subr.mxu0 %v320
      %474 = vmatpush1.xpose.msra.mxu0 %v319
      %475 = vmatprep.subr.mxu0 %v322
      %476 = vmatpush1.xpose.msra.mxu0 %v321
      %477 = vmatprep.subr.mxu0 %v324
      %478 = vmatpush1.xpose.msra.mxu0 %v323
      %479 = vmatprep.subr.mxu0 %v326
      %480 = vmatpush1.xpose.msra.mxu0 %v325
      %481 = vmatprep.subr.mxu0 %v328
      %482 = vmatpush1.xpose.msra.mxu0 %v327
      %483 = vmatprep.mubr.f32.mxu0 %v416
      %484 = vmatmul.mubr.f32.gmra.mrb[0].mxu0 %v414
      %v485 = vpop.f32.mrb[0].mxu0
      %v486 = vadd.f32 0.0, %v485
      %v487 = vpop.f32.mrb[0].mxu0
      %v488 = vadd.f32 0.0, %v487
      %489 = vdwg.mxu0
      %v490 = vadd.f32 %v417, %v486
      %v491 = vadd.f32 %v418, %v488
      %492 = vst [vmem:[%s240] sm:$0x3f] %v490
      %493 = vst [vmem:[%s240 + $0x8] sm:$0x3f] %v491
      %v494 = vld [vmem:[%s246] sm:$0x3f]
      %495 = vmatprep.subr.mxu0 %v416
      %496 = vmatpush1.xpose.msra.mxu0 %v414
      %497 = vmatprep.subr.mxu0 0.0
      %498 = vmatpush1.xpose.msra.mxu0 0.0
      %499 = vmatprep.subr.mxu0 0.0
      %500 = vmatpush1.xpose.msra.mxu0 0.0
      %501 = vmatprep.subr.mxu0 0.0
      %502 = vmatpush1.xpose.msra.mxu0 0.0
      %503 = vmatprep.subr.mxu0 0.0
      %504 = vmatpush1.xpose.msra.mxu0 0.0
      %505 = vmatprep.subr.mxu0 0.0
      %506 = vmatpush1.xpose.msra.mxu0 0.0
      %507 = vmatprep.subr.mxu0 0.0
      %508 = vmatpush1.xpose.msra.mxu0 0.0
      %509 = vmatprep.subr.mxu0 0.0
      %510 = vmatpush1.xpose.msra.mxu0 0.0
      %511 = vmatprep.subr.mxu0 0.0
      %512 = vmatpush1.xpose.msra.mxu0 0.0
      %513 = vmatprep.subr.mxu0 0.0
      %514 = vmatpush1.xpose.msra.mxu0 0.0
      %515 = vmatprep.subr.mxu0 0.0
      %516 = vmatpush1.xpose.msra.mxu0 0.0
      %517 = vmatprep.subr.mxu0 0.0
      %518 = vmatpush1.xpose.msra.mxu0 0.0
      %519 = vmatprep.subr.mxu0 0.0
      %520 = vmatpush1.xpose.msra.mxu0 0.0
      %521 = vmatprep.subr.mxu0 0.0
      %522 = vmatpush1.xpose.msra.mxu0 0.0
      %523 = vmatprep.subr.mxu0 0.0
      %524 = vmatpush1.xpose.msra.mxu0 0.0
      %525 = vmatprep.subr.mxu0 0.0
      %526 = vmatpush1.xpose.msra.mxu0 0.0
      %527 = vmatprep.subr.mxu0 0.0
      %528 = vmatpush1.xpose.msra.mxu0 0.0
      %529 = vmatprep.subr.mxu0 0.0
      %530 = vmatpush1.xpose.msra.mxu0 0.0
      %531 = vmatprep.subr.mxu0 0.0
      %532 = vmatpush1.xpose.msra.mxu0 0.0
      %533 = vmatprep.subr.mxu0 0.0
      %534 = vmatpush1.xpose.msra.mxu0 0.0
      %535 = vmatprep.subr.mxu0 0.0
      %536 = vmatpush1.xpose.msra.mxu0 0.0
      %537 = vmatprep.subr.mxu0 0.0
      %538 = vmatpush1.xpose.msra.mxu0 0.0
      %539 = vmatprep.subr.mxu0 0.0
      %540 = vmatpush1.xpose.msra.mxu0 0.0
      %541 = vmatprep.subr.mxu0 0.0
      %542 = vmatpush1.xpose.msra.mxu0 0.0
      %543 = vmatprep.subr.mxu0 0.0
      %544 = vmatpush1.xpose.msra.mxu0 0.0
      %545 = vmatprep.subr.mxu0 0.0
      %546 = vmatpush1.xpose.msra.mxu0 0.0
      %547 = vmatprep.subr.mxu0 0.0
      %548 = vmatpush1.xpose.msra.mxu0 0.0
      %549 = vmatprep.subr.mxu0 0.0
      %550 = vmatpush1.xpose.msra.mxu0 0.0
      %551 = vmatprep.subr.mxu0 0.0
      %552 = vmatpush1.xpose.msra.mxu0 0.0
      %553 = vmatprep.subr.mxu0 0.0
      %554 = vmatpush1.xpose.msra.mxu0 0.0
      %555 = vmatprep.subr.mxu0 0.0
      %556 = vmatpush1.xpose.msra.mxu0 0.0
      %557 = vmatprep.subr.mxu0 0.0
      %558 = vmatpush1.xpose.msra.mxu0 0.0
      %559 = vmatprep.mubr.f32.mxu0 %v416
      %560 = vmatmul.mubr.f32.gmra.mrb[0].mxu0 %v414
      %v561 = vpop.f32.mrb[0].mxu0
      %v562 = vadd.f32 0.0, %v561
      %v563 = vpop.f32.mrb[0].mxu0
      %564 = vdwg.mxu0
      %v565 = vadd.f32 %v494, %v562
      %vm566 = vcmask 46080
      %567 = vst.msk [vmem:[%s246] sm:$0x3f] %vm566, %v565
      %s568 = scalar_lea.vmem %s232, 512
      %v569 = vld [vmem:[%s568] sm:$0xff]
      %v570 = vld [vmem:[%s568 + $0x8] sm:$0xff]
      %v571 = vld [vmem:[%s568 + $0x10] sm:$0xff]
      %v572 = vld [vmem:[%s568 + $0x18] sm:$0xff]
      %v573 = vld [vmem:[%s568 + $0x20] sm:$0xff]
      %v574 = vld [vmem:[%s568 + $0x28] sm:$0xff]
      %v575 = vld [vmem:[%s568 + $0x30] sm:$0xff]
      %v576 = vld [vmem:[%s568 + $0x38] sm:$0xff]
      %v577 = vld [vmem:[%s568 + $0x40] sm:$0xff]
      %v578 = vld [vmem:[%s568 + $0x48] sm:$0xff]
      %v579 = vld [vmem:[%s568 + $0x50] sm:$0xff]
      %v580 = vld [vmem:[%s568 + $0x58] sm:$0xff]
      %v581 = vld [vmem:[%s568 + $0x60] sm:$0xff]
      %v582 = vld [vmem:[%s568 + $0x68] sm:$0xff]
      %v583 = vld [vmem:[%s568 + $0x70] sm:$0xff]
      %v584 = vld [vmem:[%s568 + $0x78] sm:$0xff]
      %v585 = vld [vmem:[%s568 + $0x80] sm:$0xff]
      %v586 = vld [vmem:[%s568 + $0x88] sm:$0xff]
      %v587 = vld [vmem:[%s568 + $0x90] sm:$0xff]
      %v588 = vld [vmem:[%s568 + $0x98] sm:$0xff]
      %v589 = vld [vmem:[%s568 + $0xa0] sm:$0xff]
      %v590 = vld [vmem:[%s568 + $0xa8] sm:$0xff]
      %v591 = vld [vmem:[%s568 + $0xb0] sm:$0xff]
      %v592 = vld [vmem:[%s568 + $0xb8] sm:$0xff]
      %v593 = vld [vmem:[%s568 + $0xc0] sm:$0xff]
      %v594 = vld [vmem:[%s568 + $0xc8] sm:$0xff]
      %v595 = vld [vmem:[%s568 + $0xd0] sm:$0xff]
      %v596 = vld [vmem:[%s568 + $0xd8] sm:$0xff]
      %v597 = vld [vmem:[%s568 + $0xe0] sm:$0xff]
      %v598 = vld [vmem:[%s568 + $0xe8] sm:$0xff]
      %v599 = vld [vmem:[%s568 + $0xf0] sm:$0xff]
      %v600 = vld [vmem:[%s568 + $0xf8] sm:$0xff]
      %v601 = vld [vmem:[%s568 + $0x100] sm:$0xff]
      %v602 = vld [vmem:[%s568 + $0x108] sm:$0xff]
      %v603 = vld [vmem:[%s568 + $0x110] sm:$0xff]
      %v604 = vld [vmem:[%s568 + $0x118] sm:$0xff]
      %v605 = vld [vmem:[%s568 + $0x120] sm:$0xff]
      %v606 = vld [vmem:[%s568 + $0x128] sm:$0xff]
      %v607 = vld [vmem:[%s568 + $0x130] sm:$0xff]
      %v608 = vld [vmem:[%s568 + $0x138] sm:$0xff]
      %v609 = vld [vmem:[%s568 + $0x140] sm:$0xff]
      %v610 = vld [vmem:[%s568 + $0x148] sm:$0xff]
      %v611 = vld [vmem:[%s568 + $0x150] sm:$0xff]
      %v612 = vld [vmem:[%s568 + $0x158] sm:$0xff]
      %v613 = vld [vmem:[%s568 + $0x160] sm:$0xff]
      %v614 = vld [vmem:[%s568 + $0x168] sm:$0xff]
      %v615 = vld [vmem:[%s568 + $0x170] sm:$0xff]
      %v616 = vld [vmem:[%s568 + $0x178] sm:$0xff]
      %v617 = vld [vmem:[%s568 + $0x180] sm:$0xff]
      %v618 = vld [vmem:[%s568 + $0x188] sm:$0xff]
      %v619 = vld [vmem:[%s568 + $0x190] sm:$0xff]
      %v620 = vld [vmem:[%s568 + $0x198] sm:$0xff]
      %v621 = vld [vmem:[%s568 + $0x1a0] sm:$0xff]
      %v622 = vld [vmem:[%s568 + $0x1a8] sm:$0xff]
      %v623 = vld [vmem:[%s568 + $0x1b0] sm:$0xff]
      %v624 = vld [vmem:[%s568 + $0x1b8] sm:$0xff]
      %v625 = vld [vmem:[%s568 + $0x1c0] sm:$0xff]
      %v626 = vld [vmem:[%s568 + $0x1c8] sm:$0xff]
      %v627 = vld [vmem:[%s568 + $0x1d0] sm:$0xff]
      %v628 = vld [vmem:[%s568 + $0x1d8] sm:$0xff]
      %v629 = vld [vmem:[%s568 + $0x1e0] sm:$0xff]
      %v630 = vld [vmem:[%s568 + $0x1e8] sm:$0xff]
      %v631 = vld [vmem:[%s568 + $0x1f0] sm:$0xff]
      %v632 = vld [vmem:[%s568 + $0x1f8] sm:$0xff]
      %633 = vmatprep.subr.mxu0 %v570
      %634 = vmatpush1.msra.mxu0 %v569
      %635 = vmatprep.subr.mxu0 %v572
      %636 = vmatpush1.msra.mxu0 %v571
      %637 = vmatprep.subr.mxu0 %v574
      %638 = vmatpush1.msra.mxu0 %v573
      %639 = vmatprep.subr.mxu0 %v576
      %640 = vmatpush1.msra.mxu0 %v575
      %641 = vmatprep.subr.mxu0 %v578
      %642 = vmatpush1.msra.mxu0 %v577
      %643 = vmatprep.subr.mxu0 %v580
      %644 = vmatpush1.msra.mxu0 %v579
      %645 = vmatprep.subr.mxu0 %v582
      %646 = vmatpush1.msra.mxu0 %v581
      %647 = vmatprep.subr.mxu0 %v584
      %648 = vmatpush1.msra.mxu0 %v583
      %649 = vmatprep.subr.mxu0 %v586
      %650 = vmatpush1.msra.mxu0 %v585
      %651 = vmatprep.subr.mxu0 %v588
      %652 = vmatpush1.msra.mxu0 %v587
      %653 = vmatprep.subr.mxu0 %v590
      %654 = vmatpush1.msra.mxu0 %v589
      %655 = vmatprep.subr.mxu0 %v592
      %656 = vmatpush1.msra.mxu0 %v591
      %657 = vmatprep.subr.mxu0 %v594
      %658 = vmatpush1.msra.mxu0 %v593
      %659 = vmatprep.subr.mxu0 %v596
      %660 = vmatpush1.msra.mxu0 %v595
      %661 = vmatprep.subr.mxu0 %v598
      %662 = vmatpush1.msra.mxu0 %v597
      %663 = vmatprep.subr.mxu0 %v600
      %664 = vmatpush1.msra.mxu0 %v599
      %665 = vmatprep.subr.mxu0 %v602
      %666 = vmatpush1.msra.mxu0 %v601
      %667 = vmatprep.subr.mxu0 %v604
      %668 = vmatpush1.msra.mxu0 %v603
      %669 = vmatprep.subr.mxu0 %v606
      %670 = vmatpush1.msra.mxu0 %v605
      %671 = vmatprep.subr.mxu0 %v608
      %672 = vmatpush1.msra.mxu0 %v607
      %673 = vmatprep.subr.mxu0 %v610
      %674 = vmatpush1.msra.mxu0 %v609
      %675 = vmatprep.subr.mxu0 %v612
      %676 = vmatpush1.msra.mxu0 %v611
      %677 = vmatprep.subr.mxu0 %v614
      %678 = vmatpush1.msra.mxu0 %v613
      %679 = vmatprep.subr.mxu0 %v616
      %680 = vmatpush1.msra.mxu0 %v615
      %681 = vmatprep.subr.mxu0 %v618
      %682 = vmatpush1.msra.mxu0 %v617
      %683 = vmatprep.subr.mxu0 %v620
      %684 = vmatpush1.msra.mxu0 %v619
      %685 = vmatprep.subr.mxu0 %v622
      %686 = vmatpush1.msra.mxu0 %v621
      %687 = vmatprep.subr.mxu0 %v624
      %688 = vmatpush1.msra.mxu0 %v623
      %689 = vmatprep.subr.mxu0 %v626
      %690 = vmatpush1.msra.mxu0 %v625
      %691 = vmatprep.subr.mxu0 %v628
      %692 = vmatpush1.msra.mxu0 %v627
      %693 = vmatprep.subr.mxu0 %v630
      %694 = vmatpush1.msra.mxu0 %v629
      %695 = vmatprep.subr.mxu0 %v632
      %696 = vmatpush1.msra.mxu0 %v631
      %697 = vmatprep.mubr.f32.mxu0 %v263
      %698 = vmatmul.mubr.f32.gmra.mrb[0].mxu0 %v262
      %v699 = vpop.f32.mrb[0].mxu0
      %v700 = vadd.f32 %v332, %v699
      %v701 = vpop.f32.mrb[0].mxu0
      %v702 = vadd.f32 %v332, %v701
      %703 = vdwg.mxu0
      %v704 = vxor.u32 %v700, 2147483648
      %v705 = vxor.u32 %v702, 2147483648
      %v706 = vmul.f32 %v704, 1.442695
      %v707 = vpow.pop %v706
      %v708 = vmul.f32 %v705, 1.442695
      %v709 = vpow.pop %v708
      %v710 = vadd.f32 %v707, 1.0
      %v711 = vadd.f32 %v709, 1.0
      %v712 = vrcp.pop %v710
      %v713 = vmul.f32 1.0, %v712
      %v714 = vrcp.pop %v711
      %v715 = vmul.f32 1.0, %v714
      %s716 = scalar_lea.vmem %s240, 16
      %v717 = vld [vmem:[%s716] sm:$0x3f]
      %v718 = vld [vmem:[%s716 + $0x8] sm:$0x3f]
      %719 = vmatprep.subr.mxu0 %v570
      %720 = vmatpush1.xpose.msra.mxu0 %v569
      %721 = vmatprep.subr.mxu0 %v572
      %722 = vmatpush1.xpose.msra.mxu0 %v571
      %723 = vmatprep.subr.mxu0 %v574
      %724 = vmatpush1.xpose.msra.mxu0 %v573
      %725 = vmatprep.subr.mxu0 %v576
      %726 = vmatpush1.xpose.msra.mxu0 %v575
      %727 = vmatprep.subr.mxu0 %v578
      %728 = vmatpush1.xpose.msra.mxu0 %v577
      %729 = vmatprep.subr.mxu0 %v580
      %730 = vmatpush1.xpose.msra.mxu0 %v579
      %731 = vmatprep.subr.mxu0 %v582
      %732 = vmatpush1.xpose.msra.mxu0 %v581
      %733 = vmatprep.subr.mxu0 %v584
      %734 = vmatpush1.xpose.msra.mxu0 %v583
      %735 = vmatprep.subr.mxu0 %v586
      %736 = vmatpush1.xpose.msra.mxu0 %v585
      %737 = vmatprep.subr.mxu0 %v588
      %738 = vmatpush1.xpose.msra.mxu0 %v587
      %739 = vmatprep.subr.mxu0 %v590
      %740 = vmatpush1.xpose.msra.mxu0 %v589
      %741 = vmatprep.subr.mxu0 %v592
      %742 = vmatpush1.xpose.msra.mxu0 %v591
      %743 = vmatprep.subr.mxu0 %v594
      %744 = vmatpush1.xpose.msra.mxu0 %v593
      %745 = vmatprep.subr.mxu0 %v596
      %746 = vmatpush1.xpose.msra.mxu0 %v595
      %747 = vmatprep.subr.mxu0 %v598
      %748 = vmatpush1.xpose.msra.mxu0 %v597
      %749 = vmatprep.subr.mxu0 %v600
      %750 = vmatpush1.xpose.msra.mxu0 %v599
      %751 = vmatprep.subr.mxu0 %v602
      %752 = vmatpush1.xpose.msra.mxu0 %v601
      %753 = vmatprep.subr.mxu0 %v604
      %754 = vmatpush1.xpose.msra.mxu0 %v603
      %755 = vmatprep.subr.mxu0 %v606
      %756 = vmatpush1.xpose.msra.mxu0 %v605
      %757 = vmatprep.subr.mxu0 %v608
      %758 = vmatpush1.xpose.msra.mxu0 %v607
      %759 = vmatprep.subr.mxu0 %v610
      %760 = vmatpush1.xpose.msra.mxu0 %v609
      %761 = vmatprep.subr.mxu0 %v612
      %762 = vmatpush1.xpose.msra.mxu0 %v611
      %763 = vmatprep.subr.mxu0 %v614
      %764 = vmatpush1.xpose.msra.mxu0 %v613
      %765 = vmatprep.subr.mxu0 %v616
      %766 = vmatpush1.xpose.msra.mxu0 %v615
      %767 = vmatprep.subr.mxu0 %v618
      %768 = vmatpush1.xpose.msra.mxu0 %v617
      %769 = vmatprep.subr.mxu0 %v620
      %770 = vmatpush1.xpose.msra.mxu0 %v619
      %771 = vmatprep.subr.mxu0 %v622
      %772 = vmatpush1.xpose.msra.mxu0 %v621
      %773 = vmatprep.subr.mxu0 %v624
      %774 = vmatpush1.xpose.msra.mxu0 %v623
      %775 = vmatprep.subr.mxu0 %v626
      %776 = vmatpush1.xpose.msra.mxu0 %v625
      %777 = vmatprep.subr.mxu0 %v628
      %778 = vmatpush1.xpose.msra.mxu0 %v627
      %779 = vmatprep.subr.mxu0 %v630
      %780 = vmatpush1.xpose.msra.mxu0 %v629
      %781 = vmatprep.subr.mxu0 %v632
      %782 = vmatpush1.xpose.msra.mxu0 %v631
      %783 = vmatprep.mubr.f32.mxu0 %v715
      %784 = vmatmul.mubr.f32.gmra.mrb[0].mxu0 %v713
      %v785 = vpop.f32.mrb[0].mxu0
      %v786 = vadd.f32 0.0, %v785
      %v787 = vpop.f32.mrb[0].mxu0
      %v788 = vadd.f32 0.0, %v787
      %789 = vdwg.mxu0
      %v790 = vadd.f32 %v717, %v786
      %v791 = vadd.f32 %v718, %v788
      %792 = vst [vmem:[%s716] sm:$0x3f] %v790
      %793 = vst [vmem:[%s716 + $0x8] sm:$0x3f] %v791
      %s794 = scalar_lea.vmem %s246, 8
      %v795 = vld [vmem:[%s794] sm:$0x3f]
      %796 = vmatprep.subr.mxu0 %v715
      %797 = vmatpush1.xpose.msra.mxu0 %v713
      %798 = vmatprep.subr.mxu0 0.0
      %799 = vmatpush1.xpose.msra.mxu0 0.0
      %800 = vmatprep.subr.mxu0 0.0
      %801 = vmatpush1.xpose.msra.mxu0 0.0
      %802 = vmatprep.subr.mxu0 0.0
      %803 = vmatpush1.xpose.msra.mxu0 0.0
      %804 = vmatprep.subr.mxu0 0.0
      %805 = vmatpush1.xpose.msra.mxu0 0.0
      %806 = vmatprep.subr.mxu0 0.0
      %807 = vmatpush1.xpose.msra.mxu0 0.0
      %808 = vmatprep.subr.mxu0 0.0
      %809 = vmatpush1.xpose.msra.mxu0 0.0
      %810 = vmatprep.subr.mxu0 0.0
      %811 = vmatpush1.xpose.msra.mxu0 0.0
      %812 = vmatprep.subr.mxu0 0.0
      %813 = vmatpush1.xpose.msra.mxu0 0.0
      %814 = vmatprep.subr.mxu0 0.0
      %815 = vmatpush1.xpose.msra.mxu0 0.0
      %816 = vmatprep.subr.mxu0 0.0
      %817 = vmatpush1.xpose.msra.mxu0 0.0
      %818 = vmatprep.subr.mxu0 0.0
      %819 = vmatpush1.xpose.msra.mxu0 0.0
      %820 = vmatprep.subr.mxu0 0.0
      %821 = vmatpush1.xpose.msra.mxu0 0.0
      %822 = vmatprep.subr.mxu0 0.0
      %823 = vmatpush1.xpose.msra.mxu0 0.0
      %824 = vmatprep.subr.mxu0 0.0
      %825 = vmatpush1.xpose.msra.mxu0 0.0
      %826 = vmatprep.subr.mxu0 0.0
      %827 = vmatpush1.xpose.msra.mxu0 0.0
      %828 = vmatprep.subr.mxu0 0.0
      %829 = vmatpush1.xpose.msra.mxu0 0.0
      %830 = vmatprep.subr.mxu0 0.0
      %831 = vmatpush1.xpose.msra.mxu0 0.0
      %832 = vmatprep.subr.mxu0 0.0
      %833 = vmatpush1.xpose.msra.mxu0 0.0
      %834 = vmatprep.subr.mxu0 0.0
      %835 = vmatpush1.xpose.msra.mxu0 0.0
      %836 = vmatprep.subr.mxu0 0.0
      %837 = vmatpush1.xpose.msra.mxu0 0.0
      %838 = vmatprep.subr.mxu0 0.0
      %839 = vmatpush1.xpose.msra.mxu0 0.0
      %840 = vmatprep.subr.mxu0 0.0
      %841 = vmatpush1.xpose.msra.mxu0 0.0
      %842 = vmatprep.subr.mxu0 0.0
      %843 = vmatpush1.xpose.msra.mxu0 0.0
      %844 = vmatprep.subr.mxu0 0.0
      %845 = vmatpush1.xpose.msra.mxu0 0.0
      %846 = vmatprep.subr.mxu0 0.0
      %847 = vmatpush1.xpose.msra.mxu0 0.0
      %848 = vmatprep.subr.mxu0 0.0
      %849 = vmatpush1.xpose.msra.mxu0 0.0
      %850 = vmatprep.subr.mxu0 0.0
      %851 = vmatpush1.xpose.msra.mxu0 0.0
      %852 = vmatprep.subr.mxu0 0.0
      %853 = vmatpush1.xpose.msra.mxu0 0.0
      %854 = vmatprep.subr.mxu0 0.0
      %855 = vmatpush1.xpose.msra.mxu0 0.0
      %856 = vmatprep.subr.mxu0 0.0
      %857 = vmatpush1.xpose.msra.mxu0 0.0
      %858 = vmatprep.subr.mxu0 0.0
      %859 = vmatpush1.xpose.msra.mxu0 0.0
      %860 = vmatprep.mubr.f32.mxu0 %v715
      %861 = vmatmul.mubr.f32.gmra.mrb[0].mxu0 %v713
      %v862 = vpop.f32.mrb[0].mxu0
      %v863 = vadd.f32 0.0, %v862
      %v864 = vpop.f32.mrb[0].mxu0
      %865 = vdwg.mxu0
      %v866 = vadd.f32 %v795, %v863
      %867 = vst.msk [vmem:[%s794] sm:$0x3f] %vm566, %v866
      %s868 = scalar_lea.vmem %s232, 1024
      %v869 = vld [vmem:[%s868] sm:$0xff]
      %v870 = vld [vmem:[%s868 + $0x8] sm:$0xff]
      %v871 = vld [vmem:[%s868 + $0x10] sm:$0xff]
      %v872 = vld [vmem:[%s868 + $0x18] sm:$0xff]
      %v873 = vld [vmem:[%s868 + $0x20] sm:$0xff]
      %v874 = vld [vmem:[%s868 + $0x28] sm:$0xff]
      %v875 = vld [vmem:[%s868 + $0x30] sm:$0xff]
      %v876 = vld [vmem:[%s868 + $0x38] sm:$0xff]
      %v877 = vld [vmem:[%s868 + $0x40] sm:$0xff]
      %v878 = vld [vmem:[%s868 + $0x48] sm:$0xff]
      %v879 = vld [vmem:[%s868 + $0x50] sm:$0xff]
      %v880 = vld [vmem:[%s868 + $0x58] sm:$0xff]
      %v881 = vld [vmem:[%s868 + $0x60] sm:$0xff]
      %v882 = vld [vmem:[%s868 + $0x68] sm:$0xff]
      %v883 = vld [vmem:[%s868 + $0x70] sm:$0xff]
      %v884 = vld [vmem:[%s868 + $0x78] sm:$0xff]
      %v885 = vld [vmem:[%s868 + $0x80] sm:$0xff]
      %v886 = vld [vmem:[%s868 + $0x88] sm:$0xff]
      %v887 = vld [vmem:[%s868 + $0x90] sm:$0xff]
      %v888 = vld [vmem:[%s868 + $0x98] sm:$0xff]
      %v889 = vld [vmem:[%s868 + $0xa0] sm:$0xff]
      %v890 = vld [vmem:[%s868 + $0xa8] sm:$0xff]
      %v891 = vld [vmem:[%s868 + $0xb0] sm:$0xff]
      %v892 = vld [vmem:[%s868 + $0xb8] sm:$0xff]
      %v893 = vld [vmem:[%s868 + $0xc0] sm:$0xff]
      %v894 = vld [vmem:[%s868 + $0xc8] sm:$0xff]
      %v895 = vld [vmem:[%s868 + $0xd0] sm:$0xff]
      %v896 = vld [vmem:[%s868 + $0xd8] sm:$0xff]
      %v897 = vld [vmem:[%s868 + $0xe0] sm:$0xff]
      %v898 = vld [vmem:[%s868 + $0xe8] sm:$0xff]
      %v899 = vld [vmem:[%s868 + $0xf0] sm:$0xff]
      %v900 = vld [vmem:[%s868 + $0xf8] sm:$0xff]
      %v901 = vld [vmem:[%s868 + $0x100] sm:$0xff]
      %v902 = vld [vmem:[%s868 + $0x108] sm:$0xff]
      %v903 = vld [vmem:[%s868 + $0x110] sm:$0xff]
      %v904 = vld [vmem:[%s868 + $0x118] sm:$0xff]
      %v905 = vld [vmem:[%s868 + $0x120] sm:$0xff]
      %v906 = vld [vmem:[%s868 + $0x128] sm:$0xff]
      %v907 = vld [vmem:[%s868 + $0x130] sm:$0xff]
      %v908 = vld [vmem:[%s868 + $0x138] sm:$0xff]
      %v909 = vld [vmem:[%s868 + $0x140] sm:$0xff]
      %v910 = vld [vmem:[%s868 + $0x148] sm:$0xff]
      %v911 = vld [vmem:[%s868 + $0x150] sm:$0xff]
      %v912 = vld [vmem:[%s868 + $0x158] sm:$0xff]
      %v913 = vld [vmem:[%s868 + $0x160] sm:$0xff]
      %v914 = vld [vmem:[%s868 + $0x168] sm:$0xff]
      %v915 = vld [vmem:[%s868 + $0x170] sm:$0xff]
      %v916 = vld [vmem:[%s868 + $0x178] sm:$0xff]
      %v917 = vld [vmem:[%s868 + $0x180] sm:$0xff]
      %v918 = vld [vmem:[%s868 + $0x188] sm:$0xff]
      %v919 = vld [vmem:[%s868 + $0x190] sm:$0xff]
      %v920 = vld [vmem:[%s868 + $0x198] sm:$0xff]
      %v921 = vld [vmem:[%s868 + $0x1a0] sm:$0xff]
      %v922 = vld [vmem:[%s868 + $0x1a8] sm:$0xff]
      %v923 = vld [vmem:[%s868 + $0x1b0] sm:$0xff]
      %v924 = vld [vmem:[%s868 + $0x1b8] sm:$0xff]
      %v925 = vld [vmem:[%s868 + $0x1c0] sm:$0xff]
      %v926 = vld [vmem:[%s868 + $0x1c8] sm:$0xff]
      %v927 = vld [vmem:[%s868 + $0x1d0] sm:$0xff]
      %v928 = vld [vmem:[%s868 + $0x1d8] sm:$0xff]
      %v929 = vld [vmem:[%s868 + $0x1e0] sm:$0xff]
      %v930 = vld [vmem:[%s868 + $0x1e8] sm:$0xff]
      %v931 = vld [vmem:[%s868 + $0x1f0] sm:$0xff]
      %v932 = vld [vmem:[%s868 + $0x1f8] sm:$0xff]
      %933 = vmatprep.subr.mxu0 %v870
      %934 = vmatpush1.msra.mxu0 %v869
      %935 = vmatprep.subr.mxu0 %v872
      %936 = vmatpush1.msra.mxu0 %v871
      %937 = vmatprep.subr.mxu0 %v874
      %938 = vmatpush1.msra.mxu0 %v873
      %939 = vmatprep.subr.mxu0 %v876
      %940 = vmatpush1.msra.mxu0 %v875
      %941 = vmatprep.subr.mxu0 %v878
      %942 = vmatpush1.msra.mxu0 %v877
      %943 = vmatprep.subr.mxu0 %v880
      %944 = vmatpush1.msra.mxu0 %v879
      %945 = vmatprep.subr.mxu0 %v882
      %946 = vmatpush1.msra.mxu0 %v881
      %947 = vmatprep.subr.mxu0 %v884
      %948 = vmatpush1.msra.mxu0 %v883
      %949 = vmatprep.subr.mxu0 %v886
      %950 = vmatpush1.msra.mxu0 %v885
      %951 = vmatprep.subr.mxu0 %v888
      %952 = vmatpush1.msra.mxu0 %v887
      %953 = vmatprep.subr.mxu0 %v890
      %954 = vmatpush1.msra.mxu0 %v889
      %955 = vmatprep.subr.mxu0 %v892
      %956 = vmatpush1.msra.mxu0 %v891
      %957 = vmatprep.subr.mxu0 %v894
      %958 = vmatpush1.msra.mxu0 %v893
      %959 = vmatprep.subr.mxu0 %v896
      %960 = vmatpush1.msra.mxu0 %v895
      %961 = vmatprep.subr.mxu0 %v898
      %962 = vmatpush1.msra.mxu0 %v897
      %963 = vmatprep.subr.mxu0 %v900
      %964 = vmatpush1.msra.mxu0 %v899
      %965 = vmatprep.subr.mxu0 %v902
      %966 = vmatpush1.msra.mxu0 %v901
      %967 = vmatprep.subr.mxu0 %v904
      %968 = vmatpush1.msra.mxu0 %v903
      %969 = vmatprep.subr.mxu0 %v906
      %970 = vmatpush1.msra.mxu0 %v905
      %971 = vmatprep.subr.mxu0 %v908
      %972 = vmatpush1.msra.mxu0 %v907
      %973 = vmatprep.subr.mxu0 %v910
      %974 = vmatpush1.msra.mxu0 %v909
      %975 = vmatprep.subr.mxu0 %v912
      %976 = vmatpush1.msra.mxu0 %v911
      %977 = vmatprep.subr.mxu0 %v914
      %978 = vmatpush1.msra.mxu0 %v913
      %979 = vmatprep.subr.mxu0 %v916
      %980 = vmatpush1.msra.mxu0 %v915
      %981 = vmatprep.subr.mxu0 %v918
      %982 = vmatpush1.msra.mxu0 %v917
      %983 = vmatprep.subr.mxu0 %v920
      %984 = vmatpush1.msra.mxu0 %v919
      %985 = vmatprep.subr.mxu0 %v922
      %986 = vmatpush1.msra.mxu0 %v921
      %987 = vmatprep.subr.mxu0 %v924
      %988 = vmatpush1.msra.mxu0 %v923
      %989 = vmatprep.subr.mxu0 %v926
      %990 = vmatpush1.msra.mxu0 %v925
      %991 = vmatprep.subr.mxu0 %v928
      %992 = vmatpush1.msra.mxu0 %v927
      %993 = vmatprep.subr.mxu0 %v930
      %994 = vmatpush1.msra.mxu0 %v929
      %995 = vmatprep.subr.mxu0 %v932
      %996 = vmatpush1.msra.mxu0 %v931
      %997 = vmatprep.mubr.f32.mxu0 %v263
      %998 = vmatmul.mubr.f32.gmra.mrb[0].mxu0 %v262
      %v999 = vpop.f32.mrb[0].mxu0
      %v1000 = vadd.f32 %v332, %v999
      %v1001 = vpop.f32.mrb[0].mxu0
      %v1002 = vadd.f32 %v332, %v1001
      %1003 = vdwg.mxu0
      %v1004 = vxor.u32 %v1000, 2147483648
      %v1005 = vxor.u32 %v1002, 2147483648
      %v1006 = vmul.f32 %v1004, 1.442695
      %v1007 = vpow.pop %v1006
      %v1008 = vmul.f32 %v1005, 1.442695
      %v1009 = vpow.pop %v1008
      %v1010 = vadd.f32 %v1007, 1.0
      %v1011 = vadd.f32 %v1009, 1.0
      %v1012 = vrcp.pop %v1010
      %v1013 = vmul.f32 1.0, %v1012
      %v1014 = vrcp.pop %v1011
      %v1015 = vmul.f32 1.0, %v1014
      %s1016 = scalar_lea.vmem %s240, 32
      %v1017 = vld [vmem:[%s1016] sm:$0x3f]
      %v1018 = vld [vmem:[%s1016 + $0x8] sm:$0x3f]
      %1019 = vmatprep.subr.mxu0 %v870
      %1020 = vmatpush1.xpose.msra.mxu0 %v869
      %1021 = vmatprep.subr.mxu0 %v872
      %1022 = vmatpush1.xpose.msra.mxu0 %v871
      %1023 = vmatprep.subr.mxu0 %v874
      %1024 = vmatpush1.xpose.msra.mxu0 %v873
      %1025 = vmatprep.subr.mxu0 %v876
      %1026 = vmatpush1.xpose.msra.mxu0 %v875
      %1027 = vmatprep.subr.mxu0 %v878
      %1028 = vmatpush1.xpose.msra.mxu0 %v877
      %1029 = vmatprep.subr.mxu0 %v880
      %1030 = vmatpush1.xpose.msra.mxu0 %v879
      %1031 = vmatprep.subr.mxu0 %v882
      %1032 = vmatpush1.xpose.msra.mxu0 %v881
      %1033 = vmatprep.subr.mxu0 %v884
      %1034 = vmatpush1.xpose.msra.mxu0 %v883
      %1035 = vmatprep.subr.mxu0 %v886
      %1036 = vmatpush1.xpose.msra.mxu0 %v885
      %1037 = vmatprep.subr.mxu0 %v888
      %1038 = vmatpush1.xpose.msra.mxu0 %v887
      %1039 = vmatprep.subr.mxu0 %v890
      %1040 = vmatpush1.xpose.msra.mxu0 %v889
      %1041 = vmatprep.subr.mxu0 %v892
      %1042 = vmatpush1.xpose.msra.mxu0 %v891
      %1043 = vmatprep.subr.mxu0 %v894
      %1044 = vmatpush1.xpose.msra.mxu0 %v893
      %1045 = vmatprep.subr.mxu0 %v896
      %1046 = vmatpush1.xpose.msra.mxu0 %v895
      %1047 = vmatprep.subr.mxu0 %v898
      %1048 = vmatpush1.xpose.msra.mxu0 %v897
      %1049 = vmatprep.subr.mxu0 %v900
      %1050 = vmatpush1.xpose.msra.mxu0 %v899
      %1051 = vmatprep.subr.mxu0 %v902
      %1052 = vmatpush1.xpose.msra.mxu0 %v901
      %1053 = vmatprep.subr.mxu0 %v904
      %1054 = vmatpush1.xpose.msra.mxu0 %v903
      %1055 = vmatprep.subr.mxu0 %v906
      %1056 = vmatpush1.xpose.msra.mxu0 %v905
      %1057 = vmatprep.subr.mxu0 %v908
      %1058 = vmatpush1.xpose.msra.mxu0 %v907
      %1059 = vmatprep.subr.mxu0 %v910
      %1060 = vmatpush1.xpose.msra.mxu0 %v909
      %1061 = vmatprep.subr.mxu0 %v912
      %1062 = vmatpush1.xpose.msra.mxu0 %v911
      %1063 = vmatprep.subr.mxu0 %v914
      %1064 = vmatpush1.xpose.msra.mxu0 %v913
      %1065 = vmatprep.subr.mxu0 %v916
      %1066 = vmatpush1.xpose.msra.mxu0 %v915
      %1067 = vmatprep.subr.mxu0 %v918
      %1068 = vmatpush1.xpose.msra.mxu0 %v917
      %1069 = vmatprep.subr.mxu0 %v920
      %1070 = vmatpush1.xpose.msra.mxu0 %v919
      %1071 = vmatprep.subr.mxu0 %v922
      %1072 = vmatpush1.xpose.msra.mxu0 %v921
      %1073 = vmatprep.subr.mxu0 %v924
      %1074 = vmatpush1.xpose.msra.mxu0 %v923
      %1075 = vmatprep.subr.mxu0 %v926
      %1076 = vmatpush1.xpose.msra.mxu0 %v925
      %1077 = vmatprep.subr.mxu0 %v928
      %1078 = vmatpush1.xpose.msra.mxu0 %v927
      %1079 = vmatprep.subr.mxu0 %v930
      %1080 = vmatpush1.xpose.msra.mxu0 %v929
      %1081 = vmatprep.subr.mxu0 %v932
      %1082 = vmatpush1.xpose.msra.mxu0 %v931
      %1083 = vmatprep.mubr.f32.mxu0 %v1015
      %1084 = vmatmul.mubr.f32.gmra.mrb[0].mxu0 %v1013
      %v1085 = vpop.f32.mrb[0].mxu0
      %v1086 = vadd.f32 0.0, %v1085
      %v1087 = vpop.f32.mrb[0].mxu0
      %v1088 = vadd.f32 0.0, %v1087
      %1089 = vdwg.mxu0
      %v1090 = vadd.f32 %v1017, %v1086
      %v1091 = vadd.f32 %v1018, %v1088
      %1092 = vst [vmem:[%s1016] sm:$0x3f] %v1090
      %1093 = vst [vmem:[%s1016 + $0x8] sm:$0x3f] %v1091
      %s1094 = scalar_lea.vmem %s246, 16
      %v1095 = vld [vmem:[%s1094] sm:$0x3f]
      %1096 = vmatprep.subr.mxu0 %v1015
      %1097 = vmatpush1.xpose.msra.mxu0 %v1013
      %1098 = vmatprep.subr.mxu0 0.0
      %1099 = vmatpush1.xpose.msra.mxu0 0.0
      %1100 = vmatprep.subr.mxu0 0.0
      %1101 = vmatpush1.xpose.msra.mxu0 0.0
      %1102 = vmatprep.subr.mxu0 0.0
      %1103 = vmatpush1.xpose.msra.mxu0 0.0
      %1104 = vmatprep.subr.mxu0 0.0
      %1105 = vmatpush1.xpose.msra.mxu0 0.0
      %1106 = vmatprep.subr.mxu0 0.0
      %1107 = vmatpush1.xpose.msra.mxu0 0.0
      %1108 = vmatprep.subr.mxu0 0.0
      %1109 = vmatpush1.xpose.msra.mxu0 0.0
      %1110 = vmatprep.subr.mxu0 0.0
      %1111 = vmatpush1.xpose.msra.mxu0 0.0
      %1112 = vmatprep.subr.mxu0 0.0
      %1113 = vmatpush1.xpose.msra.mxu0 0.0
      %1114 = vmatprep.subr.mxu0 0.0
      %1115 = vmatpush1.xpose.msra.mxu0 0.0
      %1116 = vmatprep.subr.mxu0 0.0
      %1117 = vmatpush1.xpose.msra.mxu0 0.0
      %1118 = vmatprep.subr.mxu0 0.0
      %1119 = vmatpush1.xpose.msra.mxu0 0.0
      %1120 = vmatprep.subr.mxu0 0.0
      %1121 = vmatpush1.xpose.msra.mxu0 0.0
      %1122 = vmatprep.subr.mxu0 0.0
      %1123 = vmatpush1.xpose.msra.mxu0 0.0
      %1124 = vmatprep.subr.mxu0 0.0
      %1125 = vmatpush1.xpose.msra.mxu0 0.0
      %1126 = vmatprep.subr.mxu0 0.0
      %1127 = vmatpush1.xpose.msra.mxu0 0.0
      %1128 = vmatprep.subr.mxu0 0.0
      %1129 = vmatpush1.xpose.msra.mxu0 0.0
      %1130 = vmatprep.subr.mxu0 0.0
      %1131 = vmatpush1.xpose.msra.mxu0 0.0
      %1132 = vmatprep.subr.mxu0 0.0
      %1133 = vmatpush1.xpose.msra.mxu0 0.0
      %1134 = vmatprep.subr.mxu0 0.0
      %1135 = vmatpush1.xpose.msra.mxu0 0.0
      %1136 = vmatprep.subr.mxu0 0.0
      %1137 = vmatpush1.xpose.msra.mxu0 0.0
      %1138 = vmatprep.subr.mxu0 0.0
      %1139 = vmatpush1.xpose.msra.mxu0 0.0
      %1140 = vmatprep.subr.mxu0 0.0
      %1141 = vmatpush1.xpose.msra.mxu0 0.0
      %1142 = vmatprep.subr.mxu0 0.0
      %1143 = vmatpush1.xpose.msra.mxu0 0.0
      %1144 = vmatprep.subr.mxu0 0.0
      %1145 = vmatpush1.xpose.msra.mxu0 0.0
      %1146 = vmatprep.subr.mxu0 0.0
      %1147 = vmatpush1.xpose.msra.mxu0 0.0
      %1148 = vmatprep.subr.mxu0 0.0
      %1149 = vmatpush1.xpose.msra.mxu0 0.0
      %1150 = vmatprep.subr.mxu0 0.0
      %1151 = vmatpush1.xpose.msra.mxu0 0.0
      %1152 = vmatprep.subr.mxu0 0.0
      %1153 = vmatpush1.xpose.msra.mxu0 0.0
      %1154 = vmatprep.subr.mxu0 0.0
      %1155 = vmatpush1.xpose.msra.mxu0 0.0
      %1156 = vmatprep.subr.mxu0 0.0
      %1157 = vmatpush1.xpose.msra.mxu0 0.0
      %1158 = vmatprep.subr.mxu0 0.0
      %1159 = vmatpush1.xpose.msra.mxu0 0.0
      %1160 = vmatprep.mubr.f32.mxu0 %v1015
      %1161 = vmatmul.mubr.f32.gmra.mrb[0].mxu0 %v1013
      %v1162 = vpop.f32.mrb[0].mxu0
      %v1163 = vadd.f32 0.0, %v1162
      %v1164 = vpop.f32.mrb[0].mxu0
      %1165 = vdwg.mxu0
      %v1166 = vadd.f32 %v1095, %v1163
      %1167 = vst.msk [vmem:[%s1094] sm:$0x3f] %vm566, %v1166
      // Predicated region
      $region37: #{cossim_forward.1} parent=31 // pred_check
        %p1168 = pneg %p248
      $region38: #{cossim_forward.1} parent=31 // pred_check_branch
        %1170 = sbr.rel (%p1168) target = $region40
      $region39: #{cossim_forward.1} parent=31 // pred_region
        %v1171 = vld [vmem:[%s240] sm:$0x3f]
        %v1172 = vld [vmem:[%s240 + $0x8] sm:$0x3f]
        %v1173 = vld [vmem:[%s240 + $0x10] sm:$0x3f]
        %v1174 = vld [vmem:[%s240 + $0x18] sm:$0x3f]
        %v1175 = vld [vmem:[%s240 + $0x20] sm:$0x3f]
        %v1176 = vld [vmem:[%s240 + $0x28] sm:$0x3f]
        %v1177 = vmul.f32 %v1171, 0.00390625
        %v1178 = vmul.f32 %v1172, 0.00390625
        %v1179 = vmul.f32 %v1173, 0.00390625
        %v1180 = vmul.f32 %v1174, 0.00390625
        %v1181 = vmul.f32 %v1175, 0.00390625
        %v1182 = vmul.f32 %v1176, 0.00390625
        %1183 = vst [vmem:[%s240] sm:$0x3f] %v1177
        %1184 = vst [vmem:[%s240 + $0x8] sm:$0x3f] %v1178
        %1185 = vst [vmem:[%s240 + $0x10] sm:$0x3f] %v1179
        %1186 = vst [vmem:[%s240 + $0x18] sm:$0x3f] %v1180
        %1187 = vst [vmem:[%s240 + $0x20] sm:$0x3f] %v1181
        %1188 = vst [vmem:[%s240 + $0x28] sm:$0x3f] %v1182
      $region40: #{cossim_forward.1} parent=31 // pred_fallthru
        _
      %s1189 = smul.u32 3, %s20
      %p1190 = scmp.lt.s32.totalorder %s1189, 5
      %s1191 = scalar_select %p1190, %s1189, 5
      %s1192 = smul.addr %s1191, 2
      %s1193 = smul.addr %s1192, 8
      %s1194 = scalar_lea.vmem %s3, %s1193
      %s1195 = smul.u32 3, %s20
      %p1196 = scmp.lt.s32.totalorder %s1195, 5
      %s1197 = scalar_select %p1196, %s1195, 5
      %s1198 = smul.addr %s1197, 8
      %s1199 = scalar_lea.vmem %s4, %s1198
      // Predicated region
      $region41: #{cossim_forward.1} parent=31 // pred_check
        %p1200 = pneg %p116
      $region42: #{cossim_forward.1} parent=31 // pred_check_branch
        %1202 = sbr.rel (%p1200) target = $region44
      $region43: #{cossim_forward.1} parent=31 // pred_region
        %s1203 = smul.u32 3, %s20
      $region44: #{cossim_forward.1} parent=31 // pred_fallthru
        _
      // Predicated region
      $region45: #{cossim_forward.1} parent=31 // pred_check
        %p1204 = pneg %p142
      $region46: #{cossim_forward.1} parent=31 // pred_check_branch
        %1206 = sbr.rel (%p1204) target = $region48
      $region47: #{cossim_forward.1} parent=31 // pred_region
        %s1207 = smul.u32 3, %s20
      $region48: #{cossim_forward.1} parent=31 // pred_fallthru
        _
    $region32: #{cossim_forward.1} parent=5 // pred_fallthru
      _
    %p1208 = scmp.le.s32.totalorder 2, %s11
    // Predicated region
    $region49: #{cossim_forward.1} parent=5 // pred_check
      %p1209 = pneg %p1208
    $region50: #{cossim_forward.1} parent=5 // pred_check_branch
      %1211 = sbr.rel (%p1209) target = $region52
    $region51: #{cossim_forward.1} parent=5 // pred_region
      %s1212 = ssub.s32 %s11, 2
      // Predicated region
      $region53: #{cossim_forward.1} parent=51 // pred_check
        %p1213 = pneg %p122
      $region54: #{cossim_forward.1} parent=51 // pred_check_branch
        %1215 = sbr.rel (%p1213) target = $region56
      $region55: #{cossim_forward.1} parent=51 // pred_region
        %s1216 = smul.u32 3, %s22
        %p1217 = scmp.lt.s32.totalorder %s1216, 5
        %s1218 = scalar_select %p1217, %s1216, 5
        %s1219 = smul.addr %s1218, 2
        %s1220 = smul.addr %s1219, 8
        %s1221 = scalar_lea.vmem %s3, %s1220
      $region56: #{cossim_forward.1} parent=51 // pred_fallthru
        _
      // Predicated region
      $region57: #{cossim_forward.1} parent=51 // pred_check
        %p1222 = pneg %p148
      $region58: #{cossim_forward.1} parent=51 // pred_check_branch
        %1224 = sbr.rel (%p1222) target = $region60
      $region59: #{cossim_forward.1} parent=51 // pred_region
        %s1225 = smul.u32 3, %s22
        %p1226 = scmp.lt.s32.totalorder %s1225, 5
        %s1227 = scalar_select %p1226, %s1225, 5
        %s1228 = smul.addr %s1227, 8
        %s1229 = scalar_lea.vmem %s4, %s1228
      $region60: #{cossim_forward.1} parent=51 // pred_fallthru
        _
    $region52: #{cossim_forward.1} parent=5 // pred_fallthru
      _
  $region6: #{cossim_forward.1} parent=0 // loop_footer
    %s15 = sadd.s32 1, %s11
  $region7: #{cossim_forward.1} parent=0 // loop_footer_branch
    %10 = sbr.rel target = $region3
  $region8: #{cossim_forward.1} parent=0 // loop_exit
    _

</llo_original>
